<compile_context>
chip_gen: v6e
topology: v6e:2x2x1
jax: 0.10.0
libtpu: 0.0.40
codegen_flags: <defaults>
</compile_context>

<pallas_src>
import functools

import jax
import jax.numpy as jnp
from jax.experimental import pallas as pl
from jax.experimental.pallas import tpu as pltpu


def _round_up(x, m):
    return -(-x // m) * m


def _vmem_capacity_bytes():
    try:
        return int(pltpu.get_tpu_info().vmem_capacity_bytes)
    except Exception:
        return 64 * 1024 * 1024  # conservative: v7x physical VMEM


def _causal_dwconv_kernel(x_ref, w_dw_ref, b_dw_ref, w_pwT_ref, b_pw_ref,
                          o_ref, halo_ref, *, ts, kernel_size, pad):
    """One (batch, seq-tile) grid step.

    x_ref    : (1, TS, Dp)   input tile (native dtype: f32 or bf16)
    w_dw_ref : (K, Dp)       depthwise weights, w_dw[k, c] = torch_w_dw[c, 0, k]
    b_dw_ref : (1, Dp)       depthwise bias
    w_pwT_ref: (Dp, Dp)      pointwise weight pre-transposed to (c_in, c_out)
    b_pw_ref : (1, Dp)       pointwise bias
    o_ref    : (1, TS, Dp)   output tile
    halo_ref : (pad, Dp)     persistent scratch (input dtype); rows [pad-(K-1), pad)
                             hold the previous tile's last K-1 rows.
    """
    K = kernel_size
    halo = K - 1
    nb = ts - halo                      # number of "bulk" output rows
    s = pl.program_id(1)

    # Hoist weight/bias reads + upcasts out of the tap loops (no per-tap ref reads).
    w_dw = w_dw_ref[...].astype(jnp.float32)     # (K, Dp)
    b_dw = b_dw_ref[...].astype(jnp.float32)     # (1, Dp)

    if halo > 0:
        @pl.when(s == 0)
        def _zero_halo():
            # First sequence tile of a batch: the causal left-pad is zeros.
            halo_ref[pad - halo:pad, :] = jnp.zeros(
                (halo, halo_ref.shape[1]), halo_ref.dtype)

    # ---- depthwise causal conv ------------------------------------------------
    # Bulk rows t in [halo, ts): every tap reads the current tile directly
    # (x index = (t - halo) + k), so no staging copy and no halo involvement.
    # Accumulator initialized from tap 0 fused with the depthwise bias.
    acc = x_ref[0, 0:nb, :].astype(jnp.float32) * w_dw[0:1, :] + b_dw
    for k in range(1, K):               # K is small & static -> unrolled
        acc = acc + x_ref[0, k:k + nb, :].astype(jnp.float32) * w_dw[k:k + 1, :]

    if halo > 0:
        # Head rows t in [0, halo): taps with x index t + k - (K-1) < 0 read the
        # carried halo (previous tile's tail, or zeros for s == 0).
        head_rows = []
        for t in range(halo):
            row = b_dw
            for k in range(K):
                i = t + k - halo
                if i < 0:
                    src = halo_ref[pad + i:pad + i + 1, :]
                else:
                    src = x_ref[0, i:i + 1, :]
                row = row + src.astype(jnp.float32) * w_dw[k:k + 1, :]
            head_rows.append(row)
        h = jnp.concatenate(head_rows + [acc], axis=0)        # (ts, Dp) f32
        # Carry this tile's tail for the next sequence tile.  All halo READS above
        # happen before this store (ref effects are ordered), so this is safe.
        halo_ref[pad - halo:pad, :] = x_ref[0, ts - halo:ts, :]
    else:
        h = acc

    # ---- pointwise (1x1) conv on the MXU ---------------------------------------
    # Runs in the weight's dtype (pass bf16 weights on v6e/v7x for the bf16 MXU);
    # accumulation stays f32 via preferred_element_type.
    w_pw = w_pwT_ref[...]                                     # (Dp_in, Dp_out)
    y = jnp.dot(h.astype(w_pw.dtype), w_pw, preferred_element_type=jnp.float32)
    y = y + b_pw_ref[...].astype(jnp.float32)
    o_ref[0] = y.astype(o_ref.dtype)


def causal_depthwise_conv1d(x, w_dw, b_dw, w_pw, b_pw, kernel_size, *, seq_tile=1024):
    """x: (B, S, D). Returns (B, S, D), matching the PyTorch module's forward.

    Parameter layout (derived from the module's nn.Conv1d weights):
      w_dw: (K, D)  = torch depthwise weight (D, 1, K) with axes (k, c)
      b_dw: (1, D)
      w_pw: (D, D)  = torch pointwise weight (D, D, 1) squeezed -> (c_out, c_in)
      b_pw: (1, D)
    """
    B, S, D = x.shape
    K = kernel_size
    halo = K - 1

    # --- lane-dense channels: pad D to a multiple of 128 once (zero channels) ---
    Dp = _round_up(D, 128)
    if Dp != D:
        pc = Dp - D
        x = jnp.pad(x, ((0, 0), (0, 0), (0, pc)))
        w_dw = jnp.pad(w_dw, ((0, 0), (0, pc)))
        b_dw = jnp.pad(b_dw, ((0, 0), (0, pc)))
        w_pw = jnp.pad(w_pw, ((0, pc), (0, pc)))
        b_pw = jnp.pad(b_pw, ((0, 0), (0, pc)))

    # Pre-transpose the pointwise weight once in the wrapper: kernel sees (c_in, c_out).
    w_pw_t = jnp.transpose(w_pw)

    x_itemsize = jnp.dtype(x.dtype).itemsize
    w_itemsize = jnp.dtype(w_pw_t.dtype).itemsize

    # Halo scratch rows: sublane-aligned for both f32 (8) and bf16 (16) layouts.
    pad = max(16, _round_up(halo, 16))

    # --- per-generation VMEM budget -> sequence tile size -----------------------
    budget = int(0.75 * _vmem_capacity_bytes())     # ~96 MiB on v5e/v6e, ~48 MiB on v7x

    def _resident_bytes(ts_):
        weights = (K * Dp + Dp + Dp * Dp + Dp) * w_itemsize   # single-buffered
        io = 4 * ts_ * Dp * x_itemsize                        # 2x in + 2x out buffers
        scratch = pad * Dp * x_itemsize
        interm = 3 * ts_ * Dp * 4                             # acc / h / y f32 values
        return weights + io + scratch + interm

    # ts always a multiple of 16 (covers bf16 sublane packing), even when S < seq_tile.
    ts = min(_round_up(S, 16), _round_up(seq_tile, 16))
    while ts > 16 and _resident_bytes(ts) > budget:
        ts = _round_up(max(16, ts // 2), 16)
    assert halo < ts, "kernel_size - 1 must be smaller than the sequence tile"

    S_pad = _round_up(S, ts)
    if S_pad != S:
        x = jnp.pad(x, ((0, 0), (0, S_pad - S), (0, 0)))
    n_s = S_pad // ts
    assert n_s >= 1

    kernel = functools.partial(_causal_dwconv_kernel, ts=ts, kernel_size=K, pad=pad)

    cost = pl.CostEstimate(
        flops=int(2 * B * S_pad * Dp * Dp + 2 * B * K * S_pad * Dp),
        transcendentals=0,
        bytes_accessed=int(2 * B * S_pad * Dp * x_itemsize
                           + (K * Dp + Dp + Dp * Dp + Dp) * w_itemsize),
    )
    vmem_limit = int(min(budget, 100 * 1024 * 1024))

    def _build(single_buffer_weights):
        const_kw = dict(pipeline_mode=pl.Buffered(1)) if single_buffer_weights else {}
        in_specs = [
            pl.BlockSpec((1, ts, Dp), lambda b, s: (b, s, 0)),
            pl.BlockSpec((K, Dp), lambda b, s: (0, 0), **const_kw),
            pl.BlockSpec((1, Dp), lambda b, s: (0, 0), **const_kw),
            pl.BlockSpec((Dp, Dp), lambda b, s: (0, 0), **const_kw),
            pl.BlockSpec((1, Dp), lambda b, s: (0, 0), **const_kw),
        ]
        return pl.pallas_call(
            kernel,
            out_shape=jax.ShapeDtypeStruct((B, S_pad, Dp), x.dtype),
            grid=(B, n_s),
            in_specs=in_specs,
            out_specs=pl.BlockSpec((1, ts, Dp), lambda b, s: (b, s, 0)),
            scratch_shapes=[pltpu.VMEM((pad, Dp), x.dtype)],
            compiler_params=pltpu.CompilerParams(
                # Halo carry requires: grid = (B, n_s), S last and sequential
                # ("arbitrary"); batch is "parallel" (megacore), scratch is per-core.
                dimension_semantics=("parallel", "arbitrary"),
                vmem_limit_bytes=vmem_limit,
            ),
            cost_estimate=cost,
        )

    try:
        out = _build(True)(x, w_dw, b_dw, w_pw_t, b_pw)
    except Exception:
        # Fallback if this jax build rejects pipeline_mode=pl.Buffered(1).
        out = _build(False)(x, w_dw, b_dw, w_pw_t, b_pw)

    if S_pad != S or Dp != D:
        out = out[:, :S, :D]
    return out


def reference(x, w_dw, b_dw, w_pw, b_pw, kernel_size):
    """Pure-JAX reference mirroring the PyTorch forward (for sanity checks)."""
    B, S, D = x.shape
    K = kernel_size
    x_pad = jnp.pad(x, ((0, 0), (K - 1, 0), (0, 0)))  # (B, S+K-1, D)
    h = jnp.zeros((B, S, D), jnp.float32)
    for k in range(K):
        h = h + x_pad[:, k:k + S, :] * w_dw[k, :]
    h = h + b_dw
    y = jnp.einsum("bsd,od->bso", h, w_pw) + b_pw
    return y.astype(x.dtype)


if __name__ == "__main__":
    key = jax.random.PRNGKey(0)
    k_x, k_wdw, k_bdw, k_wpw, k_bpw, k_x2 = jax.random.split(key, 6)

    # Small shapes consistent with the module (B, S, D), kernel_size K.
    B, S, D, K = 2, 8, 32, 3
    x = jax.random.normal(k_x, (B, S, D), dtype=jnp.float32)

    # Deterministic synthetic parameters (shapes follow nn.Conv1d in the module):
    #  depthwise Conv1d(dim, dim, K, groups=dim): weight (D, 1, K) -> stored as (K, D)
    #  pointwise Conv1d(dim, dim, 1):             weight (D, D, 1) -> stored as (D, D)
    w_dw = jax.random.normal(k_wdw, (K, D), dtype=jnp.float32) * 0.1
    b_dw = jax.random.normal(k_bdw, (1, D), dtype=jnp.float32) * 0.1
    w_pw = jax.random.normal(k_wpw, (D, D), dtype=jnp.float32) * 0.1
    b_pw = jax.random.normal(k_bpw, (1, D), dtype=jnp.float32) * 0.1

    # 1) single-tile, f32 end-to-end (exact parity with the reference).
    out = jax.block_until_ready(causal_depthwise_conv1d(x, w_dw, b_dw, w_pw, b_pw, K))
    ref = reference(x, w_dw, b_dw, w_pw, b_pw, K)
    assert out.shape == (B, S, D)
    assert jnp.allclose(out, ref, atol=1e-5, rtol=1e-5), "mismatch (single tile, f32)"

    # 2) multi-tile halo-carry path (3 sequence tiles per batch).
    S2 = 48
    x2 = jax.random.normal(k_x2, (B, S2, D), dtype=jnp.float32)
    out2 = jax.block_until_ready(
        causal_depthwise_conv1d(x2, w_dw, b_dw, w_pw, b_pw, K, seq_tile=16))
    ref2 = reference(x2, w_dw, b_dw, w_pw, b_pw, K)
    assert out2.shape == (B, S2, D)
    assert jnp.allclose(out2, ref2, atol=1e-5, rtol=1e-5), "mismatch (tiled S, f32)"

    # 3) bf16 activations + bf16 pointwise weight (bf16 MXU path; intentional
    #    precision drop vs f32 reference -> loose tolerance).
    xb = x2.astype(jnp.bfloat16)
    outb = jax.block_until_ready(causal_depthwise_conv1d(
        xb, w_dw, b_dw, w_pw.astype(jnp.bfloat16), b_pw, K, seq_tile=16))
    assert outb.shape == (B, S2, D)
    assert jnp.allclose(outb.astype(jnp.float32), ref2, atol=1e-1, rtol=1e-1), \
        "mismatch (tiled S, bf16)"

    print("KERNEL_OK")
</pallas_src>

<mosaic_0001>
module attributes {stable_mosaic.version = 11 : i64} {
  func.func @_causal_dwconv_kernel(%arg0: i32, %arg1: i32, %arg2: memref<1x16x128xf32, #tpu.memory_space<vmem>>, %arg3: memref<3x128xf32, #tpu.memory_space<vmem>>, %arg4: memref<1x128xf32, #tpu.memory_space<vmem>>, %arg5: memref<128x128xf32, #tpu.memory_space<vmem>>, %arg6: memref<1x128xf32, #tpu.memory_space<vmem>>, %arg7: memref<1x16x128xf32, #tpu.memory_space<vmem>>, %arg8: memref<16x128xf32, #tpu.memory_space<vmem>>) attributes {dimension_semantics = [#tpu.dimension_semantics<parallel>, #tpu.dimension_semantics<arbitrary>], iteration_bounds = array<i64: 2, 1>, scalar_prefetch = 0 : i64, scratch_operands = 1 : i64, tpu.core_type = #tpu.core_type<tc>, window_params = [{transform_indices = @transform_0, window_bounds = array<i64: 1, 16, 128>}, {pipeline_mode = #tpu.pipeline_mode<synchronous>, transform_indices = @transform_1, window_bounds = array<i64: 3, 128>}, {pipeline_mode = #tpu.pipeline_mode<synchronous>, transform_indices = @transform_2, window_bounds = array<i64: 1, 128>}, {pipeline_mode = #tpu.pipeline_mode<synchronous>, transform_indices = @transform_3, window_bounds = array<i64: 128, 128>}, {pipeline_mode = #tpu.pipeline_mode<synchronous>, transform_indices = @transform_4, window_bounds = array<i64: 1, 128>}, {transform_indices = @transform_5, window_bounds = array<i64: 1, 16, 128>}]} {
    %c0 = arith.constant 0 : index
    %c0_0 = arith.constant 0 : index
    %0 = vector.load %arg3[%c0, %c0_0] : memref<3x128xf32, #tpu.memory_space<vmem>>, vector<3x128xf32>
    %c0_1 = arith.constant 0 : index
    %c0_2 = arith.constant 0 : index
    %1 = vector.load %arg4[%c0_1, %c0_2] : memref<1x128xf32, #tpu.memory_space<vmem>>, vector<1x128xf32>
    %c0_i32 = arith.constant 0 : i32
    %2 = arith.cmpi eq, %arg1, %c0_i32 : i32
    %3 = arith.extui %2 : i1 to i32
    %c0_i32_3 = arith.constant 0 : i32
    %4 = arith.cmpi ne, %3, %c0_i32_3 : i32
    scf.if %4 {
      %cst_36 = arith.constant 0.000000e+00 : f32
      %63 = vector.broadcast %cst_36 : f32 to vector<2x128xf32>
      %c14_37 = arith.constant 14 : index
      %c0_38 = arith.constant 0 : index
      %64 = vector.load %arg8[%c14_37, %c0_38] : memref<16x128xf32, #tpu.memory_space<vmem>>, vector<2x128xf32>
      tpu.vector_store %arg8[%c14_37, %c0_38], %63 {strides = array<i32>} : memref<16x128xf32, #tpu.memory_space<vmem>>, vector<2x128xf32>,
    } else {
    }
    %c0_4 = arith.constant 0 : index
    %c0_5 = arith.constant 0 : index
    %c0_6 = arith.constant 0 : index
    %5 = vector.load %arg2[%c0_4, %c0_5, %c0_6] : memref<1x16x128xf32, #tpu.memory_space<vmem>>, vector<1x14x128xf32>
    %6 = vector.shape_cast %5 : vector<1x14x128xf32> to vector<14x128xf32>
    %7 = vector.extract_strided_slice %0 {offsets = [0, 0], sizes = [1, 128], strides = [1, 1]} : vector<3x128xf32> to vector<1x128xf32>
    %8 = vector.broadcast %7 : vector<1x128xf32> to vector<14x128xf32>
    %9 = arith.mulf %6, %8 : vector<14x128xf32>
    %10 = vector.broadcast %1 : vector<1x128xf32> to vector<14x128xf32>
    %11 = arith.addf %9, %10 : vector<14x128xf32>
    %c0_7 = arith.constant 0 : index
    %c1 = arith.constant 1 : index
    %c0_8 = arith.constant 0 : index
    %12 = vector.load %arg2[%c0_7, %c1, %c0_8] : memref<1x16x128xf32, #tpu.memory_space<vmem>>, vector<1x14x128xf32>
    %13 = vector.shape_cast %12 : vector<1x14x128xf32> to vector<14x128xf32>
    %14 = vector.extract_strided_slice %0 {offsets = [1, 0], sizes = [1, 128], strides = [1, 1]} : vector<3x128xf32> to vector<1x128xf32>
    %15 = vector.broadcast %14 : vector<1x128xf32> to vector<14x128xf32>
    %16 = arith.mulf %13, %15 : vector<14x128xf32>
    %17 = arith.addf %11, %16 : vector<14x128xf32>
    %c0_9 = arith.constant 0 : index
    %c2 = arith.constant 2 : index
    %c0_10 = arith.constant 0 : index
    %18 = vector.load %arg2[%c0_9, %c2, %c0_10] : memref<1x16x128xf32, #tpu.memory_space<vmem>>, vector<1x14x128xf32>
    %19 = vector.shape_cast %18 : vector<1x14x128xf32> to vector<14x128xf32>
    %20 = vector.extract_strided_slice %0 {offsets = [2, 0], sizes = [1, 128], strides = [1, 1]} : vector<3x128xf32> to vector<1x128xf32>
    %21 = vector.broadcast %20 : vector<1x128xf32> to vector<14x128xf32>
    %22 = arith.mulf %19, %21 : vector<14x128xf32>
    %23 = arith.addf %17, %22 : vector<14x128xf32>
    %c14 = arith.constant 14 : index
    %c0_11 = arith.constant 0 : index
    %24 = vector.load %arg8[%c14, %c0_11] : memref<16x128xf32, #tpu.memory_space<vmem>>, vector<1x128xf32>
    %25 = vector.extract_strided_slice %0 {offsets = [0, 0], sizes = [1, 128], strides = [1, 1]} : vector<3x128xf32> to vector<1x128xf32>
    %26 = arith.mulf %24, %25 : vector<1x128xf32>
    %27 = arith.addf %1, %26 : vector<1x128xf32>
    %c15 = arith.constant 15 : index
    %c0_12 = arith.constant 0 : index
    %28 = vector.load %arg8[%c15, %c0_12] : memref<16x128xf32, #tpu.memory_space<vmem>>, vector<1x128xf32>
    %29 = vector.extract_strided_slice %0 {offsets = [1, 0], sizes = [1, 128], strides = [1, 1]} : vector<3x128xf32> to vector<1x128xf32>
    %30 = arith.mulf %28, %29 : vector<1x128xf32>
    %31 = arith.addf %27, %30 : vector<1x128xf32>
    %c0_13 = arith.constant 0 : index
    %c0_14 = arith.constant 0 : index
    %c0_15 = arith.constant 0 : index
    %32 = vector.load %arg2[%c0_13, %c0_14, %c0_15] : memref<1x16x128xf32, #tpu.memory_space<vmem>>, vector<1x1x128xf32>
    %33 = vector.shape_cast %32 : vector<1x1x128xf32> to vector<1x128xf32>
    %34 = vector.extract_strided_slice %0 {offsets = [2, 0], sizes = [1, 128], strides = [1, 1]} : vector<3x128xf32> to vector<1x128xf32>
    %35 = arith.mulf %33, %34 : vector<1x128xf32>
    %36 = arith.addf %31, %35 : vector<1x128xf32>
    %c15_16 = arith.constant 15 : index
    %c0_17 = arith.constant 0 : index
    %37 = vector.load %arg8[%c15_16, %c0_17] : memref<16x128xf32, #tpu.memory_space<vmem>>, vector<1x128xf32>
    %38 = vector.extract_strided_slice %0 {offsets = [0, 0], sizes = [1, 128], strides = [1, 1]} : vector<3x128xf32> to vector<1x128xf32>
    %39 = arith.mulf %37, %38 : vector<1x128xf32>
    %40 = arith.addf %1, %39 : vector<1x128xf32>
    %c0_18 = arith.constant 0 : index
    %c0_19 = arith.constant 0 : index
    %c0_20 = arith.constant 0 : index
    %41 = vector.load %arg2[%c0_18, %c0_19, %c0_20] : memref<1x16x128xf32, #tpu.memory_space<vmem>>, vector<1x1x128xf32>
    %42 = vector.shape_cast %41 : vector<1x1x128xf32> to vector<1x128xf32>
    %43 = vector.extract_strided_slice %0 {offsets = [1, 0], sizes = [1, 128], strides = [1, 1]} : vector<3x128xf32> to vector<1x128xf32>
    %44 = arith.mulf %42, %43 : vector<1x128xf32>
    %45 = arith.addf %40, %44 : vector<1x128xf32>
    %c0_21 = arith.constant 0 : index
    %c1_22 = arith.constant 1 : index
    %c0_23 = arith.constant 0 : index
    %46 = vector.load %arg2[%c0_21, %c1_22, %c0_23] : memref<1x16x128xf32, #tpu.memory_space<vmem>>, vector<1x1x128xf32>
    %47 = vector.shape_cast %46 : vector<1x1x128xf32> to vector<1x128xf32>
    %48 = vector.extract_strided_slice %0 {offsets = [2, 0], sizes = [1, 128], strides = [1, 1]} : vector<3x128xf32> to vector<1x128xf32>
    %49 = arith.mulf %47, %48 : vector<1x128xf32>
    %50 = arith.addf %45, %49 : vector<1x128xf32>
    %51 = tpu.concatenate %36, %50, %23 in 0 : vector<1x128xf32>, vector<1x128xf32>, vector<14x128xf32> -> vector<16x128xf32>
    %c0_24 = arith.constant 0 : index
    %c14_25 = arith.constant 14 : index
    %c0_26 = arith.constant 0 : index
    %52 = vector.load %arg2[%c0_24, %c14_25, %c0_26] : memref<1x16x128xf32, #tpu.memory_space<vmem>>, vector<1x2x128xf32>
    %53 = vector.shape_cast %52 : vector<1x2x128xf32> to vector<2x128xf32>
    %c14_27 = arith.constant 14 : index
    %c0_28 = arith.constant 0 : index
    %54 = vector.load %arg8[%c14_27, %c0_28] : memref<16x128xf32, #tpu.memory_space<vmem>>, vector<2x128xf32>
    tpu.vector_store %arg8[%c14_27, %c0_28], %53 {strides = array<i32>} : memref<16x128xf32, #tpu.memory_space<vmem>>, vector<2x128xf32>,
    %c0_29 = arith.constant 0 : index
    %c0_30 = arith.constant 0 : index
    %55 = vector.load %arg5[%c0_29, %c0_30] : memref<128x128xf32, #tpu.memory_space<vmem>>, vector<128x128xf32>
    %cst = arith.constant dense<0.000000e+00> : vector<16x128xf32>
    %56 = tpu.matmul %51, %55, %cst {dimension_numbers = #tpu.dot_dimension_numbers<[1], [0], [0], [1], [0, 0, 1, 1], [], []>} : vector<16x128xf32>, vector<128x128xf32>, vector<16x128xf32> -> vector<16x128xf32>
    %c0_31 = arith.constant 0 : index
    %c0_32 = arith.constant 0 : index
    %57 = vector.load %arg6[%c0_31, %c0_32] : memref<1x128xf32, #tpu.memory_space<vmem>>, vector<1x128xf32>
    %58 = vector.broadcast %57 : vector<1x128xf32> to vector<16x128xf32>
    %59 = arith.addf %56, %58 : vector<16x128xf32>
    %c0_33 = arith.constant 0 : index
    %c0_34 = arith.constant 0 : index
    %c0_35 = arith.constant 0 : index
    %60 = vector.load %arg7[%c0_33, %c0_34, %c0_35] : memref<1x16x128xf32, #tpu.memory_space<vmem>>, vector<1x16x128xf32>
    %61 = vector.shape_cast %60 : vector<1x16x128xf32> to vector<16x128xf32>
    %62 = vector.shape_cast %59 : vector<16x128xf32> to vector<1x16x128xf32>
    tpu.vector_store %arg7[%c0_33, %c0_34, %c0_35], %62 {strides = array<i32>} : memref<1x16x128xf32, #tpu.memory_space<vmem>>, vector<1x16x128xf32>,
    return
  }
  func.func @transform_0(%arg0: i32, %arg1: i32) -> (i32, i32, i32) {
    %c0_i32 = arith.constant 0 : i32
    %c0_i32_0 = arith.constant 0 : i32
    return %arg0, %arg1, %c0_i32 : i32, i32, i32
  }
  func.func @transform_1(%arg0: i32, %arg1: i32) -> (i32, i32) {
    %c0_i32 = arith.constant 0 : i32
    %c0_i32_0 = arith.constant 0 : i32
    %c0_i32_1 = arith.constant 0 : i32
    return %c0_i32, %c0_i32_0 : i32, i32
  }
  func.func @transform_2(%arg0: i32, %arg1: i32) -> (i32, i32) {
    %c0_i32 = arith.constant 0 : i32
    %c0_i32_0 = arith.constant 0 : i32
    %c0_i32_1 = arith.constant 0 : i32
    return %c0_i32, %c0_i32_0 : i32, i32
  }
  func.func @transform_3(%arg0: i32, %arg1: i32) -> (i32, i32) {
    %c0_i32 = arith.constant 0 : i32
    %c0_i32_0 = arith.constant 0 : i32
    %c0_i32_1 = arith.constant 0 : i32
    return %c0_i32, %c0_i32_0 : i32, i32
  }
  func.func @transform_4(%arg0: i32, %arg1: i32) -> (i32, i32) {
    %c0_i32 = arith.constant 0 : i32
    %c0_i32_0 = arith.constant 0 : i32
    %c0_i32_1 = arith.constant 0 : i32
    return %c0_i32, %c0_i32_0 : i32, i32
  }
  func.func @transform_5(%arg0: i32, %arg1: i32) -> (i32, i32, i32) {
    %c0_i32 = arith.constant 0 : i32
    %c0_i32_0 = arith.constant 0 : i32
    return %arg0, %arg1, %c0_i32 : i32, i32, i32
  }
}

module attributes {stable_mosaic.version = 11 : i64} {
  func.func @_causal_dwconv_kernel(%arg0: i32, %arg1: i32, %arg2: memref<1x16x128xf32, #tpu.memory_space<vmem>>, %arg3: memref<3x128xf32, #tpu.memory_space<vmem>>, %arg4: memref<1x128xf32, #tpu.memory_space<vmem>>, %arg5: memref<128x128xf32, #tpu.memory_space<vmem>>, %arg6: memref<1x128xf32, #tpu.memory_space<vmem>>, %arg7: memref<1x16x128xf32, #tpu.memory_space<vmem>>, %arg8: memref<16x128xf32, #tpu.memory_space<vmem>>) attributes {dimension_semantics = [#tpu.dimension_semantics<parallel>, #tpu.dimension_semantics<arbitrary>], iteration_bounds = array<i64: 2, 1>, scalar_prefetch = 0 : i64, scratch_operands = 1 : i64, tpu.core_type = #tpu.core_type<tc>, window_params = [{transform_indices = @transform_0, window_bounds = array<i64: 1, 16, 128>}, {pipeline_mode = #tpu.pipeline_mode<synchronous>, transform_indices = @transform_1, window_bounds = array<i64: 3, 128>}, {pipeline_mode = #tpu.pipeline_mode<synchronous>, transform_indices = @transform_2, window_bounds = array<i64: 1, 128>}, {pipeline_mode = #tpu.pipeline_mode<synchronous>, transform_indices = @transform_3, window_bounds = array<i64: 128, 128>}, {pipeline_mode = #tpu.pipeline_mode<synchronous>, transform_indices = @transform_4, window_bounds = array<i64: 1, 128>}, {transform_indices = @transform_5, window_bounds = array<i64: 1, 16, 128>}]} {
    %c0 = arith.constant 0 : index
    %c0_0 = arith.constant 0 : index
    %0 = vector.load %arg3[%c0, %c0_0] : memref<3x128xf32, #tpu.memory_space<vmem>>, vector<3x128xf32>
    %c0_1 = arith.constant 0 : index
    %c0_2 = arith.constant 0 : index
    %1 = vector.load %arg4[%c0_1, %c0_2] : memref<1x128xf32, #tpu.memory_space<vmem>>, vector<1x128xf32>
    %c0_i32 = arith.constant 0 : i32
    %2 = arith.cmpi eq, %arg1, %c0_i32 : i32
    %3 = arith.extui %2 : i1 to i32
    %c0_i32_3 = arith.constant 0 : i32
    %4 = arith.cmpi ne, %3, %c0_i32_3 : i32
    scf.if %4 {
      %cst_36 = arith.constant 0.000000e+00 : f32
      %63 = vector.broadcast %cst_36 : f32 to vector<2x128xf32>
      %c14_37 = arith.constant 14 : index
      %c0_38 = arith.constant 0 : index
      %64 = vector.load %arg8[%c14_37, %c0_38] : memref<16x128xf32, #tpu.memory_space<vmem>>, vector<2x128xf32>
      tpu.vector_store %arg8[%c14_37, %c0_38], %63 {strides = array<i32>} : memref<16x128xf32, #tpu.memory_space<vmem>>, vector<2x128xf32>,
    } else {
    }
    %c0_4 = arith.constant 0 : index
    %c0_5 = arith.constant 0 : index
    %c0_6 = arith.constant 0 : index
    %5 = vector.load %arg2[%c0_4, %c0_5, %c0_6] : memref<1x16x128xf32, #tpu.memory_space<vmem>>, vector<1x14x128xf32>
    %6 = vector.shape_cast %5 : vector<1x14x128xf32> to vector<14x128xf32>
    %7 = vector.extract_strided_slice %0 {offsets = [0, 0], sizes = [1, 128], strides = [1, 1]} : vector<3x128xf32> to vector<1x128xf32>
    %8 = vector.broadcast %7 : vector<1x128xf32> to vector<14x128xf32>
    %9 = arith.mulf %6, %8 : vector<14x128xf32>
    %10 = vector.broadcast %1 : vector<1x128xf32> to vector<14x128xf32>
    %11 = arith.addf %9, %10 : vector<14x128xf32>
    %c0_7 = arith.constant 0 : index
    %c1 = arith.constant 1 : index
    %c0_8 = arith.constant 0 : index
    %12 = vector.load %arg2[%c0_7, %c1, %c0_8] : memref<1x16x128xf32, #tpu.memory_space<vmem>>, vector<1x14x128xf32>
    %13 = vector.shape_cast %12 : vector<1x14x128xf32> to vector<14x128xf32>
    %14 = vector.extract_strided_slice %0 {offsets = [1, 0], sizes = [1, 128], strides = [1, 1]} : vector<3x128xf32> to vector<1x128xf32>
    %15 = vector.broadcast %14 : vector<1x128xf32> to vector<14x128xf32>
    %16 = arith.mulf %13, %15 : vector<14x128xf32>
    %17 = arith.addf %11, %16 : vector<14x128xf32>
    %c0_9 = arith.constant 0 : index
    %c2 = arith.constant 2 : index
    %c0_10 = arith.constant 0 : index
    %18 = vector.load %arg2[%c0_9, %c2, %c0_10] : memref<1x16x128xf32, #tpu.memory_space<vmem>>, vector<1x14x128xf32>
    %19 = vector.shape_cast %18 : vector<1x14x128xf32> to vector<14x128xf32>
    %20 = vector.extract_strided_slice %0 {offsets = [2, 0], sizes = [1, 128], strides = [1, 1]} : vector<3x128xf32> to vector<1x128xf32>
    %21 = vector.broadcast %20 : vector<1x128xf32> to vector<14x128xf32>
    %22 = arith.mulf %19, %21 : vector<14x128xf32>
    %23 = arith.addf %17, %22 : vector<14x128xf32>
    %c14 = arith.constant 14 : index
    %c0_11 = arith.constant 0 : index
    %24 = vector.load %arg8[%c14, %c0_11] : memref<16x128xf32, #tpu.memory_space<vmem>>, vector<1x128xf32>
    %25 = vector.extract_strided_slice %0 {offsets = [0, 0], sizes = [1, 128], strides = [1, 1]} : vector<3x128xf32> to vector<1x128xf32>
    %26 = arith.mulf %24, %25 : vector<1x128xf32>
    %27 = arith.addf %1, %26 : vector<1x128xf32>
    %c15 = arith.constant 15 : index
    %c0_12 = arith.constant 0 : index
    %28 = vector.load %arg8[%c15, %c0_12] : memref<16x128xf32, #tpu.memory_space<vmem>>, vector<1x128xf32>
    %29 = vector.extract_strided_slice %0 {offsets = [1, 0], sizes = [1, 128], strides = [1, 1]} : vector<3x128xf32> to vector<1x128xf32>
    %30 = arith.mulf %28, %29 : vector<1x128xf32>
    %31 = arith.addf %27, %30 : vector<1x128xf32>
    %c0_13 = arith.constant 0 : index
    %c0_14 = arith.constant 0 : index
    %c0_15 = arith.constant 0 : index
    %32 = vector.load %arg2[%c0_13, %c0_14, %c0_15] : memref<1x16x128xf32, #tpu.memory_space<vmem>>, vector<1x1x128xf32>
    %33 = vector.shape_cast %32 : vector<1x1x128xf32> to vector<1x128xf32>
    %34 = vector.extract_strided_slice %0 {offsets = [2, 0], sizes = [1, 128], strides = [1, 1]} : vector<3x128xf32> to vector<1x128xf32>
    %35 = arith.mulf %33, %34 : vector<1x128xf32>
    %36 = arith.addf %31, %35 : vector<1x128xf32>
    %c15_16 = arith.constant 15 : index
    %c0_17 = arith.constant 0 : index
    %37 = vector.load %arg8[%c15_16, %c0_17] : memref<16x128xf32, #tpu.memory_space<vmem>>, vector<1x128xf32>
    %38 = vector.extract_strided_slice %0 {offsets = [0, 0], sizes = [1, 128], strides = [1, 1]} : vector<3x128xf32> to vector<1x128xf32>
    %39 = arith.mulf %37, %38 : vector<1x128xf32>
    %40 = arith.addf %1, %39 : vector<1x128xf32>
    %c0_18 = arith.constant 0 : index
    %c0_19 = arith.constant 0 : index
    %c0_20 = arith.constant 0 : index
    %41 = vector.load %arg2[%c0_18, %c0_19, %c0_20] : memref<1x16x128xf32, #tpu.memory_space<vmem>>, vector<1x1x128xf32>
    %42 = vector.shape_cast %41 : vector<1x1x128xf32> to vector<1x128xf32>
    %43 = vector.extract_strided_slice %0 {offsets = [1, 0], sizes = [1, 128], strides = [1, 1]} : vector<3x128xf32> to vector<1x128xf32>
    %44 = arith.mulf %42, %43 : vector<1x128xf32>
    %45 = arith.addf %40, %44 : vector<1x128xf32>
    %c0_21 = arith.constant 0 : index
    %c1_22 = arith.constant 1 : index
    %c0_23 = arith.constant 0 : index
    %46 = vector.load %arg2[%c0_21, %c1_22, %c0_23] : memref<1x16x128xf32, #tpu.memory_space<vmem>>, vector<1x1x128xf32>
    %47 = vector.shape_cast %46 : vector<1x1x128xf32> to vector<1x128xf32>
    %48 = vector.extract_strided_slice %0 {offsets = [2, 0], sizes = [1, 128], strides = [1, 1]} : vector<3x128xf32> to vector<1x128xf32>
    %49 = arith.mulf %47, %48 : vector<1x128xf32>
    %50 = arith.addf %45, %49 : vector<1x128xf32>
    %51 = tpu.concatenate %36, %50, %23 in 0 : vector<1x128xf32>, vector<1x128xf32>, vector<14x128xf32> -> vector<16x128xf32>
    %c0_24 = arith.constant 0 : index
    %c14_25 = arith.constant 14 : index
    %c0_26 = arith.constant 0 : index
    %52 = vector.load %arg2[%c0_24, %c14_25, %c0_26] : memref<1x16x128xf32, #tpu.memory_space<vmem>>, vector<1x2x128xf32>
    %53 = vector.shape_cast %52 : vector<1x2x128xf32> to vector<2x128xf32>
    %c14_27 = arith.constant 14 : index
    %c0_28 = arith.constant 0 : index
    %54 = vector.load %arg8[%c14_27, %c0_28] : memref<16x128xf32, #tpu.memory_space<vmem>>, vector<2x128xf32>
    tpu.vector_store %arg8[%c14_27, %c0_28], %53 {strides = array<i32>} : memref<16x128xf32, #tpu.memory_space<vmem>>, vector<2x128xf32>,
    %c0_29 = arith.constant 0 : index
    %c0_30 = arith.constant 0 : index
    %55 = vector.load %arg5[%c0_29, %c0_30] : memref<128x128xf32, #tpu.memory_space<vmem>>, vector<128x128xf32>
    %cst = arith.constant dense<0.000000e+00> : vector<16x128xf32>
    %56 = tpu.matmul %51, %55, %cst {dimension_numbers = #tpu.dot_dimension_numbers<[1], [0], [0], [1], [0, 0, 1, 1], [], []>} : vector<16x128xf32>, vector<128x128xf32>, vector<16x128xf32> -> vector<16x128xf32>
    %c0_31 = arith.constant 0 : index
    %c0_32 = arith.constant 0 : index
    %57 = vector.load %arg6[%c0_31, %c0_32] : memref<1x128xf32, #tpu.memory_space<vmem>>, vector<1x128xf32>
    %58 = vector.broadcast %57 : vector<1x128xf32> to vector<16x128xf32>
    %59 = arith.addf %56, %58 : vector<16x128xf32>
    %c0_33 = arith.constant 0 : index
    %c0_34 = arith.constant 0 : index
    %c0_35 = arith.constant 0 : index
    %60 = vector.load %arg7[%c0_33, %c0_34, %c0_35] : memref<1x16x128xf32, #tpu.memory_space<vmem>>, vector<1x16x128xf32>
    %61 = vector.shape_cast %60 : vector<1x16x128xf32> to vector<16x128xf32>
    %62 = vector.shape_cast %59 : vector<16x128xf32> to vector<1x16x128xf32>
    tpu.vector_store %arg7[%c0_33, %c0_34, %c0_35], %62 {strides = array<i32>} : memref<1x16x128xf32, #tpu.memory_space<vmem>>, vector<1x16x128xf32>,
    return
  }
  func.func @transform_0(%arg0: i32, %arg1: i32) -> (i32, i32, i32) {
    %c0_i32 = arith.constant 0 : i32
    %c0_i32_0 = arith.constant 0 : i32
    return %arg0, %arg1, %c0_i32 : i32, i32, i32
  }
  func.func @transform_1(%arg0: i32, %arg1: i32) -> (i32, i32) {
    %c0_i32 = arith.constant 0 : i32
    %c0_i32_0 = arith.constant 0 : i32
    %c0_i32_1 = arith.constant 0 : i32
    return %c0_i32, %c0_i32_0 : i32, i32
  }
  func.func @transform_2(%arg0: i32, %arg1: i32) -> (i32, i32) {
    %c0_i32 = arith.constant 0 : i32
    %c0_i32_0 = arith.constant 0 : i32
    %c0_i32_1 = arith.constant 0 : i32
    return %c0_i32, %c0_i32_0 : i32, i32
  }
  func.func @transform_3(%arg0: i32, %arg1: i32) -> (i32, i32) {
    %c0_i32 = arith.constant 0 : i32
    %c0_i32_0 = arith.constant 0 : i32
    %c0_i32_1 = arith.constant 0 : i32
    return %c0_i32, %c0_i32_0 : i32, i32
  }
  func.func @transform_4(%arg0: i32, %arg1: i32) -> (i32, i32) {
    %c0_i32 = arith.constant 0 : i32
    %c0_i32_0 = arith.constant 0 : i32
    %c0_i32_1 = arith.constant 0 : i32
    return %c0_i32, %c0_i32_0 : i32, i32
  }
  func.func @transform_5(%arg0: i32, %arg1: i32) -> (i32, i32, i32) {
    %c0_i32 = arith.constant 0 : i32
    %c0_i32_0 = arith.constant 0 : i32
    return %arg0, %arg1, %c0_i32 : i32, i32, i32
  }
}

</mosaic_0001>

<llo_original>
// kernel: tpu_custom_call.1
$region0: #{tpu_custom_call.1}
  #allocation0 [shape = 'u32[]', space=smem, size = 0x4, offset = 0x4, fixed_abs, tag = 'smem constant byte address 0x4 - core index']
  #allocation1 [shape = 'u32[144,128]{1,0:T(1,128)}', space=vmem, size = 0x12000, scoped, tag = 'internal scratch']
  #allocation2 [shape = 'f32[16,128]{1,0:T(8,128)}', space=vmem, size = 0x2000, scoped, tag = 'scratch operand']
  %s0 = inlined_call_operand.hbm [shape: f32[2,16,128], index: 0, kind: input, shape index: {}]
  %s1 = inlined_call_operand.hbm [shape: f32[3,128], index: 1, kind: input, shape index: {}]
  %s2 = inlined_call_operand.vmem [shape: f32[1,128], index: 2, kind: input, shape index: {}]
  %s3 = inlined_call_operand.hbm [shape: f32[128,128], index: 3, kind: input, shape index: {}]
  %s4 = inlined_call_operand.vmem [shape: f32[1,128], index: 4, kind: input, shape index: {}]
  %s5 = inlined_call_operand.hbm [shape: f32[2,16,128], index: 5, kind: output, shape index: {}]
  %s6 = sld [smem:[#allocation0]]
  $region69: #{tpu_custom_call.1} parent=0
    _
  %s8 = ssub.s32 1, %s6
  %s9 = scalar_select 0, %s8, %s6
  $region1: #{tpu_custom_call.1} parent=0
    #allocation3 [shape = 'u8[16384]{0}', space=vmem, size = 0x4000, scoped, tag = 'input window, operand 0']
    #allocation4 [shape = 's32[2]{0}', space=sflag, size = 0x8, scoped, tag = 'scoped memory for tpu_custom_call.1']
    #allocation5 [shape = 's32[2]{0}', space=sflag, size = 0x8, scoped, tag = 'scoped memory for tpu_custom_call.1']
    #allocation6 [shape = 'u8[2048]{0}', space=vmem, size = 0x800, scoped, tag = 'input window, operand 1, single buffered']
    #allocation7 [shape = 's32[1]{0}', space=sflag, size = 0x4, scoped, tag = 'scoped memory for tpu_custom_call.1']
    #allocation8 [shape = 'u8[65536]{0}', space=vmem, size = 0x10000, scoped, tag = 'input window, operand 3, single buffered']
    #allocation9 [shape = 'u8[16384]{0}', space=vmem, size = 0x4000, scoped, tag = 'output window, operand 0']
    %10 = vsyncpa [#allocation4], 0
    %s11 = scalar_lea.sflag [#allocation4], 1
    %12 = vsyncpa %s11, 0
    %13 = vsyncpa [#allocation7], 0
    %14 = vsyncpa [#allocation5], 0
    %s15 = scalar_lea.sflag [#allocation5], 1
    %16 = vsyncpa %s15, 0
    loop: start=0, step=1, limit=4
    $region2: #{tpu_custom_call.1} parent=1 // loop_pre_header
      _
    $region3: #{tpu_custom_call.1} parent=1 // loop_header
      %s18 = sphi 0, %s22
      %p19 = scmp.ge.s32.totalorder %s18, 4
      %s25 = sphi 0, %s37
      %s26 = sphi 0, %s33
      %s27 = sphi 0, %s25
      %s28 = sphi 0, %s26
      %s29 = sphi 0, %s27
      %s30 = sphi 0, %s28
      %s42 = sphi 0, %s44
      %s45 = sphi 0, %s42
      %s46 = sphi 0, %s45
      %s62 = sphi 0, %s46
      %s66 = sphi 0, %s66
      %s68 = sphi 0, %s66
      %s69 = sphi 0, %s68
      %s83 = sphi 0, %s69
      %s87 = sphi 0, %s87
      %s89 = sphi 0, %s87
      %s90 = sphi 0, %s89
      %s104 = sphi 0, %s90
      %s108 = sphi 0, %s108
      %s110 = sphi 0, %s108
      %s111 = sphi 0, %s110
      %s125 = sphi 0, %s111
      %s129 = sphi 0, %s129
      %s131 = sphi 0, %s129
      %s132 = sphi 0, %s131
      %s146 = sphi 0, %s132
      %s154 = sphi 0, %s156
      %s157 = sphi 0, %s154
      %s158 = sphi 0, %s157
      %s174 = sphi 0, %s158
    $region4: #{tpu_custom_call.1} parent=1 // loop_header_branch
      %21 = sbr.rel (%p19) target = $region8
    $region5: #{tpu_custom_call.1} parent=1 // loop_body
      %s23 = ssub.s32 %s18, 1
      %s24 = ssub.s32 %s18, 2
      %s31 = sadd.s32 1, %s26
      %p32 = scmp.ge.s32.totalorder %s31, 1
      %s33 = scalar_select %p32, 0, %s31
      %s34 = sadd.s32 1, %s25
      %s35 = scalar_select %p32, %s34, %s25
      %p36 = scmp.ge.s32.totalorder %s35, 2
      %s37 = scalar_select %p36, 0, %s35
      %s38 = ssub.s32 %s25, %s37
      %s39 = ssub.s32 %s26, %s33
      %s40 = sor.u32 %s38, %s39
      %p41 = scmp.eq.s32.totalorder %s40, 0
      %s43 = sadd.s32 %s42, 1
      %s44 = scalar_select %p41, %s42, %s43
      %p47 = pneg %p41
      %p48 = scmp.eq.s32.totalorder %s18, 1
      %p49 = por %p47, %p48
      %p50 = scmp.ne.s32.totalorder %s42, %s45
      %p51 = scmp.eq.s32.totalorder %s18, 0
      %p52 = por %p50, %p51
      %p53 = scmp.ne.s32.totalorder %s42, %s45
      %p54 = scmp.eq.s32.totalorder %s23, 1
      %p55 = por %p53, %p54
      %p56 = scmp.ne.s32.totalorder %s45, %s46
      %p57 = scmp.eq.s32.totalorder %s23, 0
      %p58 = por %p56, %p57
      %p59 = scmp.ne.s32.totalorder %s45, %s46
      %p60 = scmp.eq.s32.totalorder %s24, 1
      %p61 = por %p59, %p60
      %p63 = scmp.ne.s32.totalorder %s46, %s62
      %p64 = scmp.eq.s32.totalorder %s24, 0
      %p65 = por %p63, %p64
      %s67 = sadd.s32 %s66, 1
      %p70 = scmp.eq.s32.totalorder %s18, 1
      %p71 = scmp.ne.s32.totalorder %s66, %s68
      %p72 = scmp.eq.s32.totalorder %s18, 0
      %p73 = por %p71, %p72
      %p74 = scmp.ne.s32.totalorder %s66, %s68
      %p75 = scmp.eq.s32.totalorder %s23, 1
      %p76 = por %p74, %p75
      %p77 = scmp.ne.s32.totalorder %s68, %s69
      %p78 = scmp.eq.s32.totalorder %s23, 0
      %p79 = por %p77, %p78
      %p80 = scmp.ne.s32.totalorder %s68, %s69
      %p81 = scmp.eq.s32.totalorder %s24, 1
      %p82 = por %p80, %p81
      %p84 = scmp.ne.s32.totalorder %s69, %s83
      %p85 = scmp.eq.s32.totalorder %s24, 0
      %p86 = por %p84, %p85
      %s88 = sadd.s32 %s87, 1
      %p91 = scmp.eq.s32.totalorder %s18, 1
      %p92 = scmp.ne.s32.totalorder %s87, %s89
      %p93 = scmp.eq.s32.totalorder %s18, 0
      %p94 = por %p92, %p93
      %p95 = scmp.ne.s32.totalorder %s87, %s89
      %p96 = scmp.eq.s32.totalorder %s23, 1
      %p97 = por %p95, %p96
      %p98 = scmp.ne.s32.totalorder %s89, %s90
      %p99 = scmp.eq.s32.totalorder %s23, 0
      %p100 = por %p98, %p99
      %p101 = scmp.ne.s32.totalorder %s89, %s90
      %p102 = scmp.eq.s32.totalorder %s24, 1
      %p103 = por %p101, %p102
      %p105 = scmp.ne.s32.totalorder %s90, %s104
      %p106 = scmp.eq.s32.totalorder %s24, 0
      %p107 = por %p105, %p106
      %s109 = sadd.s32 %s108, 1
      %p112 = scmp.eq.s32.totalorder %s18, 1
      %p113 = scmp.ne.s32.totalorder %s108, %s110
      %p114 = scmp.eq.s32.totalorder %s18, 0
      %p115 = por %p113, %p114
      %p116 = scmp.ne.s32.totalorder %s108, %s110
      %p117 = scmp.eq.s32.totalorder %s23, 1
      %p118 = por %p116, %p117
      %p119 = scmp.ne.s32.totalorder %s110, %s111
      %p120 = scmp.eq.s32.totalorder %s23, 0
      %p121 = por %p119, %p120
      %p122 = scmp.ne.s32.totalorder %s110, %s111
      %p123 = scmp.eq.s32.totalorder %s24, 1
      %p124 = por %p122, %p123
      %p126 = scmp.ne.s32.totalorder %s111, %s125
      %p127 = scmp.eq.s32.totalorder %s24, 0
      %p128 = por %p126, %p127
      %s130 = sadd.s32 %s129, 1
      %p133 = scmp.eq.s32.totalorder %s18, 1
      %p134 = scmp.ne.s32.totalorder %s129, %s131
      %p135 = scmp.eq.s32.totalorder %s18, 0
      %p136 = por %p134, %p135
      %p137 = scmp.ne.s32.totalorder %s129, %s131
      %p138 = scmp.eq.s32.totalorder %s23, 1
      %p139 = por %p137, %p138
      %p140 = scmp.ne.s32.totalorder %s131, %s132
      %p141 = scmp.eq.s32.totalorder %s23, 0
      %p142 = por %p140, %p141
      %p143 = scmp.ne.s32.totalorder %s131, %s132
      %p144 = scmp.eq.s32.totalorder %s24, 1
      %p145 = por %p143, %p144
      %p147 = scmp.ne.s32.totalorder %s132, %s146
      %p148 = scmp.eq.s32.totalorder %s24, 0
      %p149 = por %p147, %p148
      %s150 = ssub.s32 %s25, %s37
      %s151 = ssub.s32 %s26, %s33
      %s152 = sor.u32 %s150, %s151
      %p153 = scmp.eq.s32.totalorder %s152, 0
      %s155 = sadd.s32 %s154, 1
      %s156 = scalar_select %p153, %s154, %s155
      %p159 = pneg %p153
      %p160 = scmp.eq.s32.totalorder %s18, 1
      %p161 = por %p159, %p160
      %p162 = scmp.ne.s32.totalorder %s154, %s157
      %p163 = scmp.eq.s32.totalorder %s18, 0
      %p164 = por %p162, %p163
      %p165 = scmp.ne.s32.totalorder %s154, %s157
      %p166 = scmp.eq.s32.totalorder %s23, 1
      %p167 = por %p165, %p166
      %p168 = scmp.ne.s32.totalorder %s157, %s158
      %p169 = scmp.eq.s32.totalorder %s23, 0
      %p170 = por %p168, %p169
      %p171 = scmp.ne.s32.totalorder %s157, %s158
      %p172 = scmp.eq.s32.totalorder %s24, 1
      %p173 = por %p171, %p172
      %p175 = scmp.ne.s32.totalorder %s158, %s174
      %p176 = scmp.eq.s32.totalorder %s24, 0
      %p177 = por %p175, %p176
      %p178 = scmp.le.s32.totalorder 1, %s18
      %p179 = scmp.lt.s32.totalorder %s18, 3
      %p180 = pnand %p178, %p179
      %p181 = pneg %p180
      // Predicated region
      $region9: #{tpu_custom_call.1} parent=5 // pred_check
        _
      $region10: #{tpu_custom_call.1} parent=5 // pred_check_branch
        %183 = sbr.rel (%p180) target = $region12
      $region11: #{tpu_custom_call.1} parent=5 // pred_region
        %s184 = ssub.s32 %s18, 1
        // Predicated region
        $region13: #{tpu_custom_call.1} parent=11 // pred_check
          %p185 = pneg %p79
        $region14: #{tpu_custom_call.1} parent=11 // pred_check_branch
          %187 = sbr.rel (%p185) target = $region16
        $region15: #{tpu_custom_call.1} parent=11 // pred_region
          %s189 = ssub.s32 64, 64
          %190 = vsyncadd [#allocation7], %s189
          %s192 = sshll.u32 [#allocation6], 4
          %s193 = int_to_ptr.vmem [resolvable:$true] %s192
          %195 = dma.hbm_to_vmem [thread:$0]  %s1, 64, %s193, [#allocation7]
        $region16: #{tpu_custom_call.1} parent=11 // pred_fallthru
          _
        // Predicated region
        $region17: #{tpu_custom_call.1} parent=11 // pred_check
          %p196 = pneg %p100
        $region18: #{tpu_custom_call.1} parent=11 // pred_check_branch
          %198 = sbr.rel (%p196) target = $region20
        $region19: #{tpu_custom_call.1} parent=11 // pred_region
          _
        $region20: #{tpu_custom_call.1} parent=11 // pred_fallthru
          _
        // Predicated region
        $region21: #{tpu_custom_call.1} parent=11 // pred_check
          %p199 = pneg %p121
        $region22: #{tpu_custom_call.1} parent=11 // pred_check_branch
          %201 = sbr.rel (%p199) target = $region24
        $region23: #{tpu_custom_call.1} parent=11 // pred_region
          %s203 = ssub.s32 2048, 2048
          %204 = vsyncadd [#allocation7], %s203
          %s205 = sshll.u32 [#allocation8], 4
          %s206 = int_to_ptr.vmem [resolvable:$true] %s205
          %211 = dma.hbm_to_vmem [thread:$0]  %s3, 2048, %s206, [#allocation7], 128, 128, 8
        $region24: #{tpu_custom_call.1} parent=11 // pred_fallthru
          _
        // Predicated region
        $region25: #{tpu_custom_call.1} parent=11 // pred_check
          %p212 = pneg %p142
        $region26: #{tpu_custom_call.1} parent=11 // pred_check_branch
          %214 = sbr.rel (%p212) target = $region28
        $region27: #{tpu_custom_call.1} parent=11 // pred_region
          _
        $region28: #{tpu_custom_call.1} parent=11 // pred_fallthru
          _
      $region12: #{tpu_custom_call.1} parent=5 // pred_fallthru
        _
      %p215 = scmp.lt.s32.totalorder %s18, 2
      // Predicated region
      $region29: #{tpu_custom_call.1} parent=5 // pred_check
        %p216 = pneg %p215
      $region30: #{tpu_custom_call.1} parent=5 // pred_check_branch
        %218 = sbr.rel (%p216) target = $region32
      $region31: #{tpu_custom_call.1} parent=5 // pred_region
        // Predicated region
        $region33: #{tpu_custom_call.1} parent=31 // pred_check
          %p219 = pneg %p52
        $region34: #{tpu_custom_call.1} parent=31 // pred_check_branch
          %221 = sbr.rel (%p219) target = $region36
        $region35: #{tpu_custom_call.1} parent=31 // pred_region
          %s222 = sand.u32 %s42, 1
          %s223 = scalar_lea.sflag [#allocation4], %s222
          %s224 = sand.u32 %s42, 1
          %s225 = smul.addr %s224, 16
          %s226 = scalar_lea.vmem [#allocation3], %s225
          %s227 = smul.u32 2, %s26
          %s229 = ssub.s32 256, 256
          %230 = vsyncadd %s223, %s229
          %s231 = smul.addr %s25, 2
          %s232 = sadd.s32 %s227, %s231
          %s233 = smul.addr %s232, 128
          %s234 = scalar_lea.hbm %s0, %s233
          %s235 = sshll.u32 %s226, 4
          %s236 = int_to_ptr.vmem [resolvable:$true] %s235
          %241 = dma.hbm_to_vmem [thread:$0]  %s234, 256, %s236, %s223, 128, 128, 8
        $region36: #{tpu_custom_call.1} parent=31 // pred_fallthru
          _
      $region32: #{tpu_custom_call.1} parent=5 // pred_fallthru
        _
      %p242 = scmp.le.s32.totalorder 1, %s18
      %p243 = scmp.lt.s32.totalorder %s18, 3
      %p244 = pnand %p242, %p243
      %p245 = pneg %p244
      // Predicated region
      $region37: #{tpu_custom_call.1} parent=5 // pred_check
        _
      $region38: #{tpu_custom_call.1} parent=5 // pred_check_branch
        %247 = sbr.rel (%p244) target = $region40
      $region39: #{tpu_custom_call.1} parent=5 // pred_region
        %s248 = ssub.s32 %s18, 1
        %s249 = sand.u32 %s45, 1
        %s250 = scalar_lea.sflag [#allocation4], %s249
        %s251 = sand.u32 %s45, 1
        %s252 = smul.addr %s251, 16
        %s253 = scalar_lea.vmem [#allocation3], %s252
        // Predicated region
        $region41: #{tpu_custom_call.1} parent=39 // pred_check
          %p254 = pneg %p58
        $region42: #{tpu_custom_call.1} parent=39 // pred_check_branch
          %256 = sbr.rel (%p254) target = $region44
        $region43: #{tpu_custom_call.1} parent=39 // pred_region
          %257 = dma.done %s250, 256
        $region44: #{tpu_custom_call.1} parent=39 // pred_fallthru
          _
        // Predicated region
        $region45: #{tpu_custom_call.1} parent=39 // pred_check
          %p258 = pneg %p79
        $region46: #{tpu_custom_call.1} parent=39 // pred_check_branch
          %260 = sbr.rel (%p258) target = $region48
        $region47: #{tpu_custom_call.1} parent=39 // pred_region
          %261 = dma.done [#allocation7], 64
        $region48: #{tpu_custom_call.1} parent=39 // pred_fallthru
          _
        // Predicated region
        $region49: #{tpu_custom_call.1} parent=39 // pred_check
          %p262 = pneg %p121
        $region50: #{tpu_custom_call.1} parent=39 // pred_check_branch
          %264 = sbr.rel (%p262) target = $region52
        $region51: #{tpu_custom_call.1} parent=39 // pred_region
          %265 = dma.done [#allocation7], 2048
        $region52: #{tpu_custom_call.1} parent=39 // pred_fallthru
          _
        %s266 = sand.u32 %s45, 1
        %s267 = scalar_lea.sflag [#allocation4], %s266
        %s268 = sand.u32 %s45, 1
        %s269 = smul.addr %s268, 16
        %s270 = scalar_lea.vmem [#allocation3], %s269
        %p271 = pneg %p58
        %p272 = pneg %p55
        %p273 = pneg %p79
        %p274 = pneg %p76
        %p275 = pneg %p100
        %p276 = pneg %p97
        %p277 = pneg %p121
        %p278 = pneg %p118
        %p279 = pneg %p142
        %p280 = pneg %p139
        %p281 = pneg %p170
        %p282 = pneg %p167
        %s283 = sand.u32 %s157, 1
        %s284 = scalar_lea.sflag [#allocation5], %s283
        %s285 = sand.u32 %s157, 1
        %s286 = smul.addr %s285, 16
        %s287 = scalar_lea.vmem [#allocation9], %s286
        %s288 = smul.u32 2, %s28
        %s289 = smul.u32 2, %s28
        %v290 = vld [vmem:[#allocation6] sm:$0x7]
        %v291 = vld [vmem:[%s2] sm:$0x1]
        %p292 = scmp.eq.s32.totalorder %s28, 0
        // Predicated region
        $region53: #{tpu_custom_call.1} parent=39 // pred_check
          %p293 = pneg %p292
        $region54: #{tpu_custom_call.1} parent=39 // pred_check_branch
          %295 = sbr.rel (%p293) target = $region56
        $region55: #{tpu_custom_call.1} parent=39 // pred_region
          %296 = vst [vmem:[#allocation2 + $0xe] sm:$0x3] 0.0
        $region56: #{tpu_custom_call.1} parent=39 // pred_fallthru
          _
        %v297 = vld [vmem:[%s253] sm:$0xff]
        %v298 = vld [vmem:[%s253 + $0x8] sm:$0x3f]
        %v299 = vlaneseq
        %v300 = vshrl.u32 %v299, 7
        %v301 = vsub.s32 0, %v300
        %v302 = vrot.slane %v290, %v301
        %v303 = vmul.f32 %v297, %v302
        %v304 = vmul.f32 %v298, %v302
        %v306 = vlaneseq
        %v307 = vshrl.u32 %v306, 7
        %v308 = vsub.s32 0, %v307
        %v309 = vrot.slane %v291, %v308
        %v311 = vadd.f32 %v303, %v309
        %v312 = vadd.f32 %v304, %v309
        %v313 = vld [vmem:[%s253 + $0x1] sm:$0xff]
        %v314 = vld [vmem:[%s253 + $0x9] sm:$0x3f]
        %v315 = vlaneseq
        %v316 = vshrl.u32 %v315, 7
        %v317 = vsub.s32 1, %v316
        %v318 = vrot.slane %v290, %v317
        %v319 = vmul.f32 %v313, %v318
        %v320 = vmul.f32 %v314, %v318
        %v321 = vadd.f32 %v311, %v319
        %v322 = vadd.f32 %v312, %v320
        %v323 = vld [vmem:[%s253 + $0x2] sm:$0xff]
        %v324 = vld [vmem:[%s253 + $0xa] sm:$0x3f]
        %v325 = vlaneseq
        %v326 = vshrl.u32 %v325, 7
        %v327 = vsub.s32 2, %v326
        %v328 = vrot.slane %v290, %v327
        %v329 = vmul.f32 %v323, %v328
        %v330 = vmul.f32 %v324, %v328
        %v331 = vadd.f32 %v321, %v329
        %v332 = vadd.f32 %v322, %v330
        %v333 = vld [vmem:[#allocation2 + $0xe] sm:$0x1]
        %v334 = vmul.f32 %v333, %v290
        %v335 = vadd.f32 %v291, %v334
        %v336 = vld [vmem:[#allocation2 + $0xf] sm:$0x1]
        %v338 = vrot.slane %v290, 1
        %v340 = vmul.f32 %v336, %v338
        %v341 = vadd.f32 %v335, %v340
        %v342 = vld [vmem:[%s253] sm:$0x1]
        %v343 = vrot.slane %v290, 2
        %v345 = vmul.f32 %v342, %v343
        %v346 = vadd.f32 %v341, %v345
        %v347 = vmul.f32 %v336, %v290
        %v348 = vadd.f32 %v291, %v347
        %v349 = vmul.f32 %v342, %v338
        %v350 = vadd.f32 %v348, %v349
        %v351 = vld [vmem:[%s253 + $0x1] sm:$0x1]
        %v352 = vmul.f32 %v351, %v343
        %v353 = vadd.f32 %v350, %v352
        %v355 = vlaneseq
        %v356 = vshrl.u32 %v355, 7
        %v357 = vsub.s32 0, %v356
        %v358 = vrot.slane %v353, %v357
        %vm362 = vcmask 1041408
        %v363 = vrot.slane %v331, 6
        %v364 = vrot.slane %v332, 6
        %v365 = vsel %vm362, %v363, %v364
        %vm368 = vcmask 1040384
        %v369 = vsel %vm368, %v346, %v358
        %v370 = vsel %vm362, %v369, %v363
        %v371 = vld [vmem:[%s253 + $0xe] sm:$0x3]
        %372 = vst [vmem:[#allocation2 + $0xe] sm:$0x3] %v371
        %v373 = vld [vmem:[#allocation8] sm:$0xff]
        %v374 = vld [vmem:[#allocation8 + $0x8] sm:$0xff]
        %v375 = vld [vmem:[#allocation8 + $0x10] sm:$0xff]
        %v376 = vld [vmem:[#allocation8 + $0x18] sm:$0xff]
        %v377 = vld [vmem:[#allocation8 + $0x20] sm:$0xff]
        %v378 = vld [vmem:[#allocation8 + $0x28] sm:$0xff]
        %v379 = vld [vmem:[#allocation8 + $0x30] sm:$0xff]
        %v380 = vld [vmem:[#allocation8 + $0x38] sm:$0xff]
        %v381 = vld [vmem:[#allocation8 + $0x40] sm:$0xff]
        %v382 = vld [vmem:[#allocation8 + $0x48] sm:$0xff]
        %v383 = vld [vmem:[#allocation8 + $0x50] sm:$0xff]
        %v384 = vld [vmem:[#allocation8 + $0x58] sm:$0xff]
        %v385 = vld [vmem:[#allocation8 + $0x60] sm:$0xff]
        %v386 = vld [vmem:[#allocation8 + $0x68] sm:$0xff]
        %v387 = vld [vmem:[#allocation8 + $0x70] sm:$0xff]
        %v388 = vld [vmem:[#allocation8 + $0x78] sm:$0xff]
        %v389 = vld [vmem:[%s4] sm:$0x1]
        %v391 = vlaneseq
        %v392 = vshrl.u32 %v391, 7
        %v393 = vsub.s32 0, %v392
        %v394 = vrot.slane %v389, %v393
        %396 = vmatprep.subr.mxu0 0.0
        %397 = vmatpush1.msra.mxu0 %v388
        %398 = vmatprep.subr.mxu0 0.0
        %399 = vmatpush1.msra.mxu0 %v387
        %400 = vmatprep.subr.mxu0 0.0
        %401 = vmatpush1.msra.mxu0 %v386
        %402 = vmatprep.subr.mxu0 0.0
        %403 = vmatpush1.msra.mxu0 %v385
        %404 = vmatprep.subr.mxu0 0.0
        %405 = vmatpush1.msra.mxu0 %v384
        %406 = vmatprep.subr.mxu0 0.0
        %407 = vmatpush1.msra.mxu0 %v383
        %408 = vmatprep.subr.mxu0 0.0
        %409 = vmatpush1.msra.mxu0 %v382
        %410 = vmatprep.subr.mxu0 0.0
        %411 = vmatpush1.msra.mxu0 %v381
        %412 = vmatprep.subr.mxu0 0.0
        %413 = vmatpush1.msra.mxu0 %v380
        %414 = vmatprep.subr.mxu0 0.0
        %415 = vmatpush1.msra.mxu0 %v379
        %416 = vmatprep.subr.mxu0 0.0
        %417 = vmatpush1.msra.mxu0 %v378
        %418 = vmatprep.subr.mxu0 0.0
        %419 = vmatpush1.msra.mxu0 %v377
        %420 = vmatprep.subr.mxu0 0.0
        %421 = vmatpush1.msra.mxu0 %v376
        %422 = vmatprep.subr.mxu0 0.0
        %423 = vmatpush1.msra.mxu0 %v375
        %424 = vmatprep.subr.mxu0 0.0
        %425 = vmatpush1.msra.mxu0 %v374
        %426 = vmatprep.subr.mxu0 0.0
        %427 = vmatpush1.msra.mxu0 %v373
        %428 = vmatprep.subr.mxu0 0.0
        %429 = vmatpush2.msra.mxu0 0.0
        %430 = vmatprep.subr.mxu0 0.0
        %431 = vmatpush2.msra.mxu0 0.0
        %432 = vmatprep.subr.mxu0 0.0
        %433 = vmatpush2.msra.mxu0 0.0
        %434 = vmatprep.subr.mxu0 0.0
        %435 = vmatpush2.msra.mxu0 0.0
        %436 = vmatprep.subr.mxu0 0.0
        %437 = vmatpush2.msra.mxu0 0.0
        %438 = vmatprep.subr.mxu0 0.0
        %439 = vmatpush2.msra.mxu0 0.0
        %440 = vmatprep.subr.mxu0 0.0
        %441 = vmatpush2.msra.mxu0 0.0
        %442 = vmatprep.subr.mxu0 0.0
        %443 = vmatpush2.msra.mxu0 0.0
        %444 = vmatprep.subr.mxu0 0.0
        %445 = vmatpush2.msra.mxu0 0.0
        %446 = vmatprep.subr.mxu0 0.0
        %447 = vmatpush2.msra.mxu0 0.0
        %448 = vmatprep.subr.mxu0 0.0
        %449 = vmatpush2.msra.mxu0 0.0
        %450 = vmatprep.subr.mxu0 0.0
        %451 = vmatpush2.msra.mxu0 0.0
        %452 = vmatprep.subr.mxu0 0.0
        %453 = vmatpush2.msra.mxu0 0.0
        %454 = vmatprep.subr.mxu0 0.0
        %455 = vmatpush2.msra.mxu0 0.0
        %456 = vmatprep.subr.mxu0 0.0
        %457 = vmatpush2.msra.mxu0 0.0
        %458 = vmatprep.subr.mxu0 0.0
        %459 = vmatpush2.msra.mxu0 0.0
        %460 = vmatprep.mubr.f32.mxu0 0.0
        %461 = vmatmul.mubr.f32.gmra.mxu0 %v370
        %v462 = vpop.f32.mrf.mxu0
        %v463 = vadd.f32 %v394, %v462
        %v464 = vpop.f32.mrf.mxu0
        %465 = vmatprep.mubr.f32.mxu0 0.0
        %466 = vmatmul.mubr.f32.gmra.mxu0 %v365
        %v467 = vpop.f32.mrf.mxu0
        %v468 = vadd.f32 %v394, %v467
        %v469 = vpop.f32.mrf.mxu0
        %470 = vdwg.mxu0
        %471 = vst [vmem:[%s287] sm:$0xff] %v463
        %472 = vst [vmem:[%s287 + $0x8] sm:$0xff] %v468
        %s473 = sand.u32 %s157, 1
        %s474 = scalar_lea.sflag [#allocation5], %s473
        %s475 = sand.u32 %s157, 1
        %s476 = smul.addr %s475, 16
        %s477 = scalar_lea.vmem [#allocation9], %s476
        // Predicated region
        $region57: #{tpu_custom_call.1} parent=39 // pred_check
          %p478 = pneg %p167
        $region58: #{tpu_custom_call.1} parent=39 // pred_check_branch
          %480 = sbr.rel (%p478) target = $region60
        $region59: #{tpu_custom_call.1} parent=39 // pred_region
          %s481 = smul.u32 2, %s28
          %s483 = ssub.s32 256, 256
          %484 = vsyncadd %s474, %s483
          %s485 = smul.addr %s27, 2
          %s486 = sadd.s32 %s481, %s485
          %s487 = smul.addr %s486, 128
          %s488 = scalar_lea.hbm %s5, %s487
          %s489 = sshll.u32 %s477, 4
          %s490 = int_to_ptr.vmem [resolvable:$true] %s489
          %495 = dma.vmem_to_hbm [thread:$0]  %s490, 256, %s488, %s474, 128, 128, 8
        $region60: #{tpu_custom_call.1} parent=39 // pred_fallthru
          _
      $region40: #{tpu_custom_call.1} parent=5 // pred_fallthru
        _
      %p496 = scmp.le.s32.totalorder 2, %s18
      // Predicated region
      $region61: #{tpu_custom_call.1} parent=5 // pred_check
        %p497 = pneg %p496
      $region62: #{tpu_custom_call.1} parent=5 // pred_check_branch
        %499 = sbr.rel (%p497) target = $region64
      $region63: #{tpu_custom_call.1} parent=5 // pred_region
        %s500 = ssub.s32 %s18, 2
        // Predicated region
        $region65: #{tpu_custom_call.1} parent=63 // pred_check
          %p501 = pneg %p173
        $region66: #{tpu_custom_call.1} parent=63 // pred_check_branch
          %503 = sbr.rel (%p501) target = $region68
        $region67: #{tpu_custom_call.1} parent=63 // pred_region
          %s504 = sand.u32 %s158, 1
          %s505 = scalar_lea.sflag [#allocation5], %s504
          %s506 = sand.u32 %s158, 1
          %s507 = smul.addr %s506, 16
          %s508 = scalar_lea.vmem [#allocation9], %s507
          %509 = dma.done %s505, 256
        $region68: #{tpu_custom_call.1} parent=63 // pred_fallthru
          _
      $region64: #{tpu_custom_call.1} parent=5 // pred_fallthru
        _
    $region6: #{tpu_custom_call.1} parent=1 // loop_footer
      %s22 = sadd.s32 1, %s18
    $region7: #{tpu_custom_call.1} parent=1 // loop_footer_branch
      %17 = sbr.rel target = $region3
    $region8: #{tpu_custom_call.1} parent=1 // loop_exit
      _
    %510 = vsyncpa [#allocation4], 1
    %s511 = scalar_lea.sflag [#allocation4], 1
    %512 = vsyncpa %s511, 1
    %513 = vsyncpa [#allocation7], 1
    %514 = vsyncpa [#allocation5], 1
    %s515 = scalar_lea.sflag [#allocation5], 1
    %516 = vsyncpa %s515, 1

// kernel: tpu_custom_call.1
$region0: #{tpu_custom_call.1}
  #allocation0 [shape = 'u32[]', space=smem, size = 0x4, offset = 0x4, fixed_abs, tag = 'smem constant byte address 0x4 - core index']
  #allocation1 [shape = 'u32[144,128]{1,0:T(1,128)}', space=vmem, size = 0x12000, scoped, tag = 'internal scratch']
  #allocation2 [shape = 'f32[16,128]{1,0:T(8,128)}', space=vmem, size = 0x2000, scoped, tag = 'scratch operand']
  %s0 = inlined_call_operand.hbm [shape: f32[2,16,128], index: 0, kind: input, shape index: {}]
  %s1 = inlined_call_operand.hbm [shape: f32[3,128], index: 1, kind: input, shape index: {}]
  %s2 = inlined_call_operand.vmem [shape: f32[1,128], index: 2, kind: input, shape index: {}]
  %s3 = inlined_call_operand.hbm [shape: f32[128,128], index: 3, kind: input, shape index: {}]
  %s4 = inlined_call_operand.vmem [shape: f32[1,128], index: 4, kind: input, shape index: {}]
  %s5 = inlined_call_operand.hbm [shape: f32[2,16,128], index: 5, kind: output, shape index: {}]
  %s6 = sld [smem:[#allocation0]]
  $region69: #{tpu_custom_call.1} parent=0
    _
  %s8 = ssub.s32 1, %s6
  %s9 = scalar_select 0, %s8, %s6
  $region1: #{tpu_custom_call.1} parent=0
    #allocation3 [shape = 'u8[16384]{0}', space=vmem, size = 0x4000, scoped, tag = 'input window, operand 0']
    #allocation4 [shape = 's32[2]{0}', space=sflag, size = 0x8, scoped, tag = 'scoped memory for tpu_custom_call.1']
    #allocation5 [shape = 's32[2]{0}', space=sflag, size = 0x8, scoped, tag = 'scoped memory for tpu_custom_call.1']
    #allocation6 [shape = 'u8[2048]{0}', space=vmem, size = 0x800, scoped, tag = 'input window, operand 1, single buffered']
    #allocation7 [shape = 's32[1]{0}', space=sflag, size = 0x4, scoped, tag = 'scoped memory for tpu_custom_call.1']
    #allocation8 [shape = 'u8[65536]{0}', space=vmem, size = 0x10000, scoped, tag = 'input window, operand 3, single buffered']
    #allocation9 [shape = 'u8[16384]{0}', space=vmem, size = 0x4000, scoped, tag = 'output window, operand 0']
    %10 = vsyncpa [#allocation4], 0
    %s11 = scalar_lea.sflag [#allocation4], 1
    %12 = vsyncpa %s11, 0
    %13 = vsyncpa [#allocation7], 0
    %14 = vsyncpa [#allocation5], 0
    %s15 = scalar_lea.sflag [#allocation5], 1
    %16 = vsyncpa %s15, 0
    loop: start=0, step=1, limit=4
    $region2: #{tpu_custom_call.1} parent=1 // loop_pre_header
      _
    $region3: #{tpu_custom_call.1} parent=1 // loop_header
      %s18 = sphi 0, %s22
      %p19 = scmp.ge.s32.totalorder %s18, 4
      %s25 = sphi 0, %s37
      %s26 = sphi 0, %s33
      %s27 = sphi 0, %s25
      %s28 = sphi 0, %s26
      %s29 = sphi 0, %s27
      %s30 = sphi 0, %s28
      %s42 = sphi 0, %s44
      %s45 = sphi 0, %s42
      %s46 = sphi 0, %s45
      %s62 = sphi 0, %s46
      %s66 = sphi 0, %s66
      %s68 = sphi 0, %s66
      %s69 = sphi 0, %s68
      %s83 = sphi 0, %s69
      %s87 = sphi 0, %s87
      %s89 = sphi 0, %s87
      %s90 = sphi 0, %s89
      %s104 = sphi 0, %s90
      %s108 = sphi 0, %s108
      %s110 = sphi 0, %s108
      %s111 = sphi 0, %s110
      %s125 = sphi 0, %s111
      %s129 = sphi 0, %s129
      %s131 = sphi 0, %s129
      %s132 = sphi 0, %s131
      %s146 = sphi 0, %s132
      %s154 = sphi 0, %s156
      %s157 = sphi 0, %s154
      %s158 = sphi 0, %s157
      %s174 = sphi 0, %s158
    $region4: #{tpu_custom_call.1} parent=1 // loop_header_branch
      %21 = sbr.rel (%p19) target = $region8
    $region5: #{tpu_custom_call.1} parent=1 // loop_body
      %s23 = ssub.s32 %s18, 1
      %s24 = ssub.s32 %s18, 2
      %s31 = sadd.s32 1, %s26
      %p32 = scmp.ge.s32.totalorder %s31, 1
      %s33 = scalar_select %p32, 0, %s31
      %s34 = sadd.s32 1, %s25
      %s35 = scalar_select %p32, %s34, %s25
      %p36 = scmp.ge.s32.totalorder %s35, 2
      %s37 = scalar_select %p36, 0, %s35
      %s38 = ssub.s32 %s25, %s37
      %s39 = ssub.s32 %s26, %s33
      %s40 = sor.u32 %s38, %s39
      %p41 = scmp.eq.s32.totalorder %s40, 0
      %s43 = sadd.s32 %s42, 1
      %s44 = scalar_select %p41, %s42, %s43
      %p47 = pneg %p41
      %p48 = scmp.eq.s32.totalorder %s18, 1
      %p49 = por %p47, %p48
      %p50 = scmp.ne.s32.totalorder %s42, %s45
      %p51 = scmp.eq.s32.totalorder %s18, 0
      %p52 = por %p50, %p51
      %p53 = scmp.ne.s32.totalorder %s42, %s45
      %p54 = scmp.eq.s32.totalorder %s23, 1
      %p55 = por %p53, %p54
      %p56 = scmp.ne.s32.totalorder %s45, %s46
      %p57 = scmp.eq.s32.totalorder %s23, 0
      %p58 = por %p56, %p57
      %p59 = scmp.ne.s32.totalorder %s45, %s46
      %p60 = scmp.eq.s32.totalorder %s24, 1
      %p61 = por %p59, %p60
      %p63 = scmp.ne.s32.totalorder %s46, %s62
      %p64 = scmp.eq.s32.totalorder %s24, 0
      %p65 = por %p63, %p64
      %s67 = sadd.s32 %s66, 1
      %p70 = scmp.eq.s32.totalorder %s18, 1
      %p71 = scmp.ne.s32.totalorder %s66, %s68
      %p72 = scmp.eq.s32.totalorder %s18, 0
      %p73 = por %p71, %p72
      %p74 = scmp.ne.s32.totalorder %s66, %s68
      %p75 = scmp.eq.s32.totalorder %s23, 1
      %p76 = por %p74, %p75
      %p77 = scmp.ne.s32.totalorder %s68, %s69
      %p78 = scmp.eq.s32.totalorder %s23, 0
      %p79 = por %p77, %p78
      %p80 = scmp.ne.s32.totalorder %s68, %s69
      %p81 = scmp.eq.s32.totalorder %s24, 1
      %p82 = por %p80, %p81
      %p84 = scmp.ne.s32.totalorder %s69, %s83
      %p85 = scmp.eq.s32.totalorder %s24, 0
      %p86 = por %p84, %p85
      %s88 = sadd.s32 %s87, 1
      %p91 = scmp.eq.s32.totalorder %s18, 1
      %p92 = scmp.ne.s32.totalorder %s87, %s89
      %p93 = scmp.eq.s32.totalorder %s18, 0
      %p94 = por %p92, %p93
      %p95 = scmp.ne.s32.totalorder %s87, %s89
      %p96 = scmp.eq.s32.totalorder %s23, 1
      %p97 = por %p95, %p96
      %p98 = scmp.ne.s32.totalorder %s89, %s90
      %p99 = scmp.eq.s32.totalorder %s23, 0
      %p100 = por %p98, %p99
      %p101 = scmp.ne.s32.totalorder %s89, %s90
      %p102 = scmp.eq.s32.totalorder %s24, 1
      %p103 = por %p101, %p102
      %p105 = scmp.ne.s32.totalorder %s90, %s104
      %p106 = scmp.eq.s32.totalorder %s24, 0
      %p107 = por %p105, %p106
      %s109 = sadd.s32 %s108, 1
      %p112 = scmp.eq.s32.totalorder %s18, 1
      %p113 = scmp.ne.s32.totalorder %s108, %s110
      %p114 = scmp.eq.s32.totalorder %s18, 0
      %p115 = por %p113, %p114
      %p116 = scmp.ne.s32.totalorder %s108, %s110
      %p117 = scmp.eq.s32.totalorder %s23, 1
      %p118 = por %p116, %p117
      %p119 = scmp.ne.s32.totalorder %s110, %s111
      %p120 = scmp.eq.s32.totalorder %s23, 0
      %p121 = por %p119, %p120
      %p122 = scmp.ne.s32.totalorder %s110, %s111
      %p123 = scmp.eq.s32.totalorder %s24, 1
      %p124 = por %p122, %p123
      %p126 = scmp.ne.s32.totalorder %s111, %s125
      %p127 = scmp.eq.s32.totalorder %s24, 0
      %p128 = por %p126, %p127
      %s130 = sadd.s32 %s129, 1
      %p133 = scmp.eq.s32.totalorder %s18, 1
      %p134 = scmp.ne.s32.totalorder %s129, %s131
      %p135 = scmp.eq.s32.totalorder %s18, 0
      %p136 = por %p134, %p135
      %p137 = scmp.ne.s32.totalorder %s129, %s131
      %p138 = scmp.eq.s32.totalorder %s23, 1
      %p139 = por %p137, %p138
      %p140 = scmp.ne.s32.totalorder %s131, %s132
      %p141 = scmp.eq.s32.totalorder %s23, 0
      %p142 = por %p140, %p141
      %p143 = scmp.ne.s32.totalorder %s131, %s132
      %p144 = scmp.eq.s32.totalorder %s24, 1
      %p145 = por %p143, %p144
      %p147 = scmp.ne.s32.totalorder %s132, %s146
      %p148 = scmp.eq.s32.totalorder %s24, 0
      %p149 = por %p147, %p148
      %s150 = ssub.s32 %s25, %s37
      %s151 = ssub.s32 %s26, %s33
      %s152 = sor.u32 %s150, %s151
      %p153 = scmp.eq.s32.totalorder %s152, 0
      %s155 = sadd.s32 %s154, 1
      %s156 = scalar_select %p153, %s154, %s155
      %p159 = pneg %p153
      %p160 = scmp.eq.s32.totalorder %s18, 1
      %p161 = por %p159, %p160
      %p162 = scmp.ne.s32.totalorder %s154, %s157
      %p163 = scmp.eq.s32.totalorder %s18, 0
      %p164 = por %p162, %p163
      %p165 = scmp.ne.s32.totalorder %s154, %s157
      %p166 = scmp.eq.s32.totalorder %s23, 1
      %p167 = por %p165, %p166
      %p168 = scmp.ne.s32.totalorder %s157, %s158
      %p169 = scmp.eq.s32.totalorder %s23, 0
      %p170 = por %p168, %p169
      %p171 = scmp.ne.s32.totalorder %s157, %s158
      %p172 = scmp.eq.s32.totalorder %s24, 1
      %p173 = por %p171, %p172
      %p175 = scmp.ne.s32.totalorder %s158, %s174
      %p176 = scmp.eq.s32.totalorder %s24, 0
      %p177 = por %p175, %p176
      %p178 = scmp.le.s32.totalorder 1, %s18
      %p179 = scmp.lt.s32.totalorder %s18, 3
      %p180 = pnand %p178, %p179
      %p181 = pneg %p180
      // Predicated region
      $region9: #{tpu_custom_call.1} parent=5 // pred_check
        _
      $region10: #{tpu_custom_call.1} parent=5 // pred_check_branch
        %183 = sbr.rel (%p180) target = $region12
      $region11: #{tpu_custom_call.1} parent=5 // pred_region
        %s184 = ssub.s32 %s18, 1
        // Predicated region
        $region13: #{tpu_custom_call.1} parent=11 // pred_check
          %p185 = pneg %p79
        $region14: #{tpu_custom_call.1} parent=11 // pred_check_branch
          %187 = sbr.rel (%p185) target = $region16
        $region15: #{tpu_custom_call.1} parent=11 // pred_region
          %s189 = ssub.s32 64, 64
          %190 = vsyncadd [#allocation7], %s189
          %s192 = sshll.u32 [#allocation6], 4
          %s193 = int_to_ptr.vmem [resolvable:$true] %s192
          %195 = dma.hbm_to_vmem [thread:$0]  %s1, 64, %s193, [#allocation7]
        $region16: #{tpu_custom_call.1} parent=11 // pred_fallthru
          _
        // Predicated region
        $region17: #{tpu_custom_call.1} parent=11 // pred_check
          %p196 = pneg %p100
        $region18: #{tpu_custom_call.1} parent=11 // pred_check_branch
          %198 = sbr.rel (%p196) target = $region20
        $region19: #{tpu_custom_call.1} parent=11 // pred_region
          _
        $region20: #{tpu_custom_call.1} parent=11 // pred_fallthru
          _
        // Predicated region
        $region21: #{tpu_custom_call.1} parent=11 // pred_check
          %p199 = pneg %p121
        $region22: #{tpu_custom_call.1} parent=11 // pred_check_branch
          %201 = sbr.rel (%p199) target = $region24
        $region23: #{tpu_custom_call.1} parent=11 // pred_region
          %s203 = ssub.s32 2048, 2048
          %204 = vsyncadd [#allocation7], %s203
          %s205 = sshll.u32 [#allocation8], 4
          %s206 = int_to_ptr.vmem [resolvable:$true] %s205
          %211 = dma.hbm_to_vmem [thread:$0]  %s3, 2048, %s206, [#allocation7], 128, 128, 8
        $region24: #{tpu_custom_call.1} parent=11 // pred_fallthru
          _
        // Predicated region
        $region25: #{tpu_custom_call.1} parent=11 // pred_check
          %p212 = pneg %p142
        $region26: #{tpu_custom_call.1} parent=11 // pred_check_branch
          %214 = sbr.rel (%p212) target = $region28
        $region27: #{tpu_custom_call.1} parent=11 // pred_region
          _
        $region28: #{tpu_custom_call.1} parent=11 // pred_fallthru
          _
      $region12: #{tpu_custom_call.1} parent=5 // pred_fallthru
        _
      %p215 = scmp.lt.s32.totalorder %s18, 2
      // Predicated region
      $region29: #{tpu_custom_call.1} parent=5 // pred_check
        %p216 = pneg %p215
      $region30: #{tpu_custom_call.1} parent=5 // pred_check_branch
        %218 = sbr.rel (%p216) target = $region32
      $region31: #{tpu_custom_call.1} parent=5 // pred_region
        // Predicated region
        $region33: #{tpu_custom_call.1} parent=31 // pred_check
          %p219 = pneg %p52
        $region34: #{tpu_custom_call.1} parent=31 // pred_check_branch
          %221 = sbr.rel (%p219) target = $region36
        $region35: #{tpu_custom_call.1} parent=31 // pred_region
          %s222 = sand.u32 %s42, 1
          %s223 = scalar_lea.sflag [#allocation4], %s222
          %s224 = sand.u32 %s42, 1
          %s225 = smul.addr %s224, 16
          %s226 = scalar_lea.vmem [#allocation3], %s225
          %s227 = smul.u32 2, %s26
          %s229 = ssub.s32 256, 256
          %230 = vsyncadd %s223, %s229
          %s231 = smul.addr %s25, 2
          %s232 = sadd.s32 %s227, %s231
          %s233 = smul.addr %s232, 128
          %s234 = scalar_lea.hbm %s0, %s233
          %s235 = sshll.u32 %s226, 4
          %s236 = int_to_ptr.vmem [resolvable:$true] %s235
          %241 = dma.hbm_to_vmem [thread:$0]  %s234, 256, %s236, %s223, 128, 128, 8
        $region36: #{tpu_custom_call.1} parent=31 // pred_fallthru
          _
      $region32: #{tpu_custom_call.1} parent=5 // pred_fallthru
        _
      %p242 = scmp.le.s32.totalorder 1, %s18
      %p243 = scmp.lt.s32.totalorder %s18, 3
      %p244 = pnand %p242, %p243
      %p245 = pneg %p244
      // Predicated region
      $region37: #{tpu_custom_call.1} parent=5 // pred_check
        _
      $region38: #{tpu_custom_call.1} parent=5 // pred_check_branch
        %247 = sbr.rel (%p244) target = $region40
      $region39: #{tpu_custom_call.1} parent=5 // pred_region
        %s248 = ssub.s32 %s18, 1
        %s249 = sand.u32 %s45, 1
        %s250 = scalar_lea.sflag [#allocation4], %s249
        %s251 = sand.u32 %s45, 1
        %s252 = smul.addr %s251, 16
        %s253 = scalar_lea.vmem [#allocation3], %s252
        // Predicated region
        $region41: #{tpu_custom_call.1} parent=39 // pred_check
          %p254 = pneg %p58
        $region42: #{tpu_custom_call.1} parent=39 // pred_check_branch
          %256 = sbr.rel (%p254) target = $region44
        $region43: #{tpu_custom_call.1} parent=39 // pred_region
          %257 = dma.done %s250, 256
        $region44: #{tpu_custom_call.1} parent=39 // pred_fallthru
          _
        // Predicated region
        $region45: #{tpu_custom_call.1} parent=39 // pred_check
          %p258 = pneg %p79
        $region46: #{tpu_custom_call.1} parent=39 // pred_check_branch
          %260 = sbr.rel (%p258) target = $region48
        $region47: #{tpu_custom_call.1} parent=39 // pred_region
          %261 = dma.done [#allocation7], 64
        $region48: #{tpu_custom_call.1} parent=39 // pred_fallthru
          _
        // Predicated region
        $region49: #{tpu_custom_call.1} parent=39 // pred_check
          %p262 = pneg %p121
        $region50: #{tpu_custom_call.1} parent=39 // pred_check_branch
          %264 = sbr.rel (%p262) target = $region52
        $region51: #{tpu_custom_call.1} parent=39 // pred_region
          %265 = dma.done [#allocation7], 2048
        $region52: #{tpu_custom_call.1} parent=39 // pred_fallthru
          _
        %s266 = sand.u32 %s45, 1
        %s267 = scalar_lea.sflag [#allocation4], %s266
        %s268 = sand.u32 %s45, 1
        %s269 = smul.addr %s268, 16
        %s270 = scalar_lea.vmem [#allocation3], %s269
        %p271 = pneg %p58
        %p272 = pneg %p55
        %p273 = pneg %p79
        %p274 = pneg %p76
        %p275 = pneg %p100
        %p276 = pneg %p97
        %p277 = pneg %p121
        %p278 = pneg %p118
        %p279 = pneg %p142
        %p280 = pneg %p139
        %p281 = pneg %p170
        %p282 = pneg %p167
        %s283 = sand.u32 %s157, 1
        %s284 = scalar_lea.sflag [#allocation5], %s283
        %s285 = sand.u32 %s157, 1
        %s286 = smul.addr %s285, 16
        %s287 = scalar_lea.vmem [#allocation9], %s286
        %s288 = smul.u32 2, %s28
        %s289 = smul.u32 2, %s28
        %v290 = vld [vmem:[#allocation6] sm:$0x7]
        %v291 = vld [vmem:[%s2] sm:$0x1]
        %p292 = scmp.eq.s32.totalorder %s28, 0
        // Predicated region
        $region53: #{tpu_custom_call.1} parent=39 // pred_check
          %p293 = pneg %p292
        $region54: #{tpu_custom_call.1} parent=39 // pred_check_branch
          %295 = sbr.rel (%p293) target = $region56
        $region55: #{tpu_custom_call.1} parent=39 // pred_region
          %296 = vst [vmem:[#allocation2 + $0xe] sm:$0x3] 0.0
        $region56: #{tpu_custom_call.1} parent=39 // pred_fallthru
          _
        %v297 = vld [vmem:[%s253] sm:$0xff]
        %v298 = vld [vmem:[%s253 + $0x8] sm:$0x3f]
        %v299 = vlaneseq
        %v300 = vshrl.u32 %v299, 7
        %v301 = vsub.s32 0, %v300
        %v302 = vrot.slane %v290, %v301
        %v303 = vmul.f32 %v297, %v302
        %v304 = vmul.f32 %v298, %v302
        %v306 = vlaneseq
        %v307 = vshrl.u32 %v306, 7
        %v308 = vsub.s32 0, %v307
        %v309 = vrot.slane %v291, %v308
        %v311 = vadd.f32 %v303, %v309
        %v312 = vadd.f32 %v304, %v309
        %v313 = vld [vmem:[%s253 + $0x1] sm:$0xff]
        %v314 = vld [vmem:[%s253 + $0x9] sm:$0x3f]
        %v315 = vlaneseq
        %v316 = vshrl.u32 %v315, 7
        %v317 = vsub.s32 1, %v316
        %v318 = vrot.slane %v290, %v317
        %v319 = vmul.f32 %v313, %v318
        %v320 = vmul.f32 %v314, %v318
        %v321 = vadd.f32 %v311, %v319
        %v322 = vadd.f32 %v312, %v320
        %v323 = vld [vmem:[%s253 + $0x2] sm:$0xff]
        %v324 = vld [vmem:[%s253 + $0xa] sm:$0x3f]
        %v325 = vlaneseq
        %v326 = vshrl.u32 %v325, 7
        %v327 = vsub.s32 2, %v326
        %v328 = vrot.slane %v290, %v327
        %v329 = vmul.f32 %v323, %v328
        %v330 = vmul.f32 %v324, %v328
        %v331 = vadd.f32 %v321, %v329
        %v332 = vadd.f32 %v322, %v330
        %v333 = vld [vmem:[#allocation2 + $0xe] sm:$0x1]
        %v334 = vmul.f32 %v333, %v290
        %v335 = vadd.f32 %v291, %v334
        %v336 = vld [vmem:[#allocation2 + $0xf] sm:$0x1]
        %v338 = vrot.slane %v290, 1
        %v340 = vmul.f32 %v336, %v338
        %v341 = vadd.f32 %v335, %v340
        %v342 = vld [vmem:[%s253] sm:$0x1]
        %v343 = vrot.slane %v290, 2
        %v345 = vmul.f32 %v342, %v343
        %v346 = vadd.f32 %v341, %v345
        %v347 = vmul.f32 %v336, %v290
        %v348 = vadd.f32 %v291, %v347
        %v349 = vmul.f32 %v342, %v338
        %v350 = vadd.f32 %v348, %v349
        %v351 = vld [vmem:[%s253 + $0x1] sm:$0x1]
        %v352 = vmul.f32 %v351, %v343
        %v353 = vadd.f32 %v350, %v352
        %v355 = vlaneseq
        %v356 = vshrl.u32 %v355, 7
        %v357 = vsub.s32 0, %v356
        %v358 = vrot.slane %v353, %v357
        %vm362 = vcmask 1041408
        %v363 = vrot.slane %v331, 6
        %v364 = vrot.slane %v332, 6
        %v365 = vsel %vm362, %v363, %v364
        %vm368 = vcmask 1040384
        %v369 = vsel %vm368, %v346, %v358
        %v370 = vsel %vm362, %v369, %v363
        %v371 = vld [vmem:[%s253 + $0xe] sm:$0x3]
        %372 = vst [vmem:[#allocation2 + $0xe] sm:$0x3] %v371
        %v373 = vld [vmem:[#allocation8] sm:$0xff]
        %v374 = vld [vmem:[#allocation8 + $0x8] sm:$0xff]
        %v375 = vld [vmem:[#allocation8 + $0x10] sm:$0xff]
        %v376 = vld [vmem:[#allocation8 + $0x18] sm:$0xff]
        %v377 = vld [vmem:[#allocation8 + $0x20] sm:$0xff]
        %v378 = vld [vmem:[#allocation8 + $0x28] sm:$0xff]
        %v379 = vld [vmem:[#allocation8 + $0x30] sm:$0xff]
        %v380 = vld [vmem:[#allocation8 + $0x38] sm:$0xff]
        %v381 = vld [vmem:[#allocation8 + $0x40] sm:$0xff]
        %v382 = vld [vmem:[#allocation8 + $0x48] sm:$0xff]
        %v383 = vld [vmem:[#allocation8 + $0x50] sm:$0xff]
        %v384 = vld [vmem:[#allocation8 + $0x58] sm:$0xff]
        %v385 = vld [vmem:[#allocation8 + $0x60] sm:$0xff]
        %v386 = vld [vmem:[#allocation8 + $0x68] sm:$0xff]
        %v387 = vld [vmem:[#allocation8 + $0x70] sm:$0xff]
        %v388 = vld [vmem:[#allocation8 + $0x78] sm:$0xff]
        %v389 = vld [vmem:[%s4] sm:$0x1]
        %v391 = vlaneseq
        %v392 = vshrl.u32 %v391, 7
        %v393 = vsub.s32 0, %v392
        %v394 = vrot.slane %v389, %v393
        %396 = vmatprep.subr.mxu0 0.0
        %397 = vmatpush1.msra.mxu0 %v388
        %398 = vmatprep.subr.mxu0 0.0
        %399 = vmatpush1.msra.mxu0 %v387
        %400 = vmatprep.subr.mxu0 0.0
        %401 = vmatpush1.msra.mxu0 %v386
        %402 = vmatprep.subr.mxu0 0.0
        %403 = vmatpush1.msra.mxu0 %v385
        %404 = vmatprep.subr.mxu0 0.0
        %405 = vmatpush1.msra.mxu0 %v384
        %406 = vmatprep.subr.mxu0 0.0
        %407 = vmatpush1.msra.mxu0 %v383
        %408 = vmatprep.subr.mxu0 0.0
        %409 = vmatpush1.msra.mxu0 %v382
        %410 = vmatprep.subr.mxu0 0.0
        %411 = vmatpush1.msra.mxu0 %v381
        %412 = vmatprep.subr.mxu0 0.0
        %413 = vmatpush1.msra.mxu0 %v380
        %414 = vmatprep.subr.mxu0 0.0
        %415 = vmatpush1.msra.mxu0 %v379
        %416 = vmatprep.subr.mxu0 0.0
        %417 = vmatpush1.msra.mxu0 %v378
        %418 = vmatprep.subr.mxu0 0.0
        %419 = vmatpush1.msra.mxu0 %v377
        %420 = vmatprep.subr.mxu0 0.0
        %421 = vmatpush1.msra.mxu0 %v376
        %422 = vmatprep.subr.mxu0 0.0
        %423 = vmatpush1.msra.mxu0 %v375
        %424 = vmatprep.subr.mxu0 0.0
        %425 = vmatpush1.msra.mxu0 %v374
        %426 = vmatprep.subr.mxu0 0.0
        %427 = vmatpush1.msra.mxu0 %v373
        %428 = vmatprep.subr.mxu0 0.0
        %429 = vmatpush2.msra.mxu0 0.0
        %430 = vmatprep.subr.mxu0 0.0
        %431 = vmatpush2.msra.mxu0 0.0
        %432 = vmatprep.subr.mxu0 0.0
        %433 = vmatpush2.msra.mxu0 0.0
        %434 = vmatprep.subr.mxu0 0.0
        %435 = vmatpush2.msra.mxu0 0.0
        %436 = vmatprep.subr.mxu0 0.0
        %437 = vmatpush2.msra.mxu0 0.0
        %438 = vmatprep.subr.mxu0 0.0
        %439 = vmatpush2.msra.mxu0 0.0
        %440 = vmatprep.subr.mxu0 0.0
        %441 = vmatpush2.msra.mxu0 0.0
        %442 = vmatprep.subr.mxu0 0.0
        %443 = vmatpush2.msra.mxu0 0.0
        %444 = vmatprep.subr.mxu0 0.0
        %445 = vmatpush2.msra.mxu0 0.0
        %446 = vmatprep.subr.mxu0 0.0
        %447 = vmatpush2.msra.mxu0 0.0
        %448 = vmatprep.subr.mxu0 0.0
        %449 = vmatpush2.msra.mxu0 0.0
        %450 = vmatprep.subr.mxu0 0.0
        %451 = vmatpush2.msra.mxu0 0.0
        %452 = vmatprep.subr.mxu0 0.0
        %453 = vmatpush2.msra.mxu0 0.0
        %454 = vmatprep.subr.mxu0 0.0
        %455 = vmatpush2.msra.mxu0 0.0
        %456 = vmatprep.subr.mxu0 0.0
        %457 = vmatpush2.msra.mxu0 0.0
        %458 = vmatprep.subr.mxu0 0.0
        %459 = vmatpush2.msra.mxu0 0.0
        %460 = vmatprep.mubr.f32.mxu0 0.0
        %461 = vmatmul.mubr.f32.gmra.mxu0 %v370
        %v462 = vpop.f32.mrf.mxu0
        %v463 = vadd.f32 %v394, %v462
        %v464 = vpop.f32.mrf.mxu0
        %465 = vmatprep.mubr.f32.mxu0 0.0
        %466 = vmatmul.mubr.f32.gmra.mxu0 %v365
        %v467 = vpop.f32.mrf.mxu0
        %v468 = vadd.f32 %v394, %v467
        %v469 = vpop.f32.mrf.mxu0
        %470 = vdwg.mxu0
        %471 = vst [vmem:[%s287] sm:$0xff] %v463
        %472 = vst [vmem:[%s287 + $0x8] sm:$0xff] %v468
        %s473 = sand.u32 %s157, 1
        %s474 = scalar_lea.sflag [#allocation5], %s473
        %s475 = sand.u32 %s157, 1
        %s476 = smul.addr %s475, 16
        %s477 = scalar_lea.vmem [#allocation9], %s476
        // Predicated region
        $region57: #{tpu_custom_call.1} parent=39 // pred_check
          %p478 = pneg %p167
        $region58: #{tpu_custom_call.1} parent=39 // pred_check_branch
          %480 = sbr.rel (%p478) target = $region60
        $region59: #{tpu_custom_call.1} parent=39 // pred_region
          %s481 = smul.u32 2, %s28
          %s483 = ssub.s32 256, 256
          %484 = vsyncadd %s474, %s483
          %s485 = smul.addr %s27, 2
          %s486 = sadd.s32 %s481, %s485
          %s487 = smul.addr %s486, 128
          %s488 = scalar_lea.hbm %s5, %s487
          %s489 = sshll.u32 %s477, 4
          %s490 = int_to_ptr.vmem [resolvable:$true] %s489
          %495 = dma.vmem_to_hbm [thread:$0]  %s490, 256, %s488, %s474, 128, 128, 8
        $region60: #{tpu_custom_call.1} parent=39 // pred_fallthru
          _
      $region40: #{tpu_custom_call.1} parent=5 // pred_fallthru
        _
      %p496 = scmp.le.s32.totalorder 2, %s18
      // Predicated region
      $region61: #{tpu_custom_call.1} parent=5 // pred_check
        %p497 = pneg %p496
      $region62: #{tpu_custom_call.1} parent=5 // pred_check_branch
        %499 = sbr.rel (%p497) target = $region64
      $region63: #{tpu_custom_call.1} parent=5 // pred_region
        %s500 = ssub.s32 %s18, 2
        // Predicated region
        $region65: #{tpu_custom_call.1} parent=63 // pred_check
          %p501 = pneg %p173
        $region66: #{tpu_custom_call.1} parent=63 // pred_check_branch
          %503 = sbr.rel (%p501) target = $region68
        $region67: #{tpu_custom_call.1} parent=63 // pred_region
          %s504 = sand.u32 %s158, 1
          %s505 = scalar_lea.sflag [#allocation5], %s504
          %s506 = sand.u32 %s158, 1
          %s507 = smul.addr %s506, 16
          %s508 = scalar_lea.vmem [#allocation9], %s507
          %509 = dma.done %s505, 256
        $region68: #{tpu_custom_call.1} parent=63 // pred_fallthru
          _
      $region64: #{tpu_custom_call.1} parent=5 // pred_fallthru
        _
    $region6: #{tpu_custom_call.1} parent=1 // loop_footer
      %s22 = sadd.s32 1, %s18
    $region7: #{tpu_custom_call.1} parent=1 // loop_footer_branch
      %17 = sbr.rel target = $region3
    $region8: #{tpu_custom_call.1} parent=1 // loop_exit
      _
    %510 = vsyncpa [#allocation4], 1
    %s511 = scalar_lea.sflag [#allocation4], 1
    %512 = vsyncpa %s511, 1
    %513 = vsyncpa [#allocation7], 1
    %514 = vsyncpa [#allocation5], 1
    %s515 = scalar_lea.sflag [#allocation5], 1
    %516 = vsyncpa %s515, 1

</llo_original>
